<compile_context>
chip_gen: v6e
topology: v6e:2x2x1
jax: 0.10.0
libtpu: 0.0.40
codegen_flags: <defaults>
</compile_context>

<pallas_src>
import functools
import math

import jax
import jax.numpy as jnp
from jax import lax
from jax.experimental import pallas as pl
from jax.experimental.pallas import tpu as pltpu

LN_EPS = 1e-5       # torch.nn.LayerNorm default
NEG_INF = -1e30     # finite large-negative mask (avoids NaN if rows fully masked)


def _layernorm(z, gamma, beta):
    mu = jnp.mean(z, axis=-1, keepdims=True)
    var = jnp.mean((z - mu) ** 2, axis=-1, keepdims=True)
    return (z - mu) * lax.rsqrt(var + LN_EPS) * gamma + beta


def block_kernel(
    x_ref,      # (Bt, T, C)  f32   pipelined over the batch grid axis
    bias_ref,   # (T, T)      f32   causal additive mask (built once in wrapper)
    wq_ref,     # (C, C)      bf16  (1/sqrt(hs) pre-folded into the weight)
    wk_ref,     # (C, C)      bf16
    wv_ref,     # (C, C)      bf16
    wo_ref,     # (C, C)      bf16
    bo_ref,     # (1, C)      f32
    g1_ref,     # (1, C)      f32
    be1_ref,    # (1, C)      f32
    w1_ref,     # (C, 4C)     bf16
    bb1_ref,    # (1, 4C)     f32
    w2_ref,     # (4C, C)     bf16
    bb2_ref,    # (1, C)      f32
    g2_ref,     # (1, C)      f32
    be2_ref,    # (1, C)      f32
    o_ref,      # (Bt, T, C)  f32
    att_ref,    # (Bt*T, C)   f32   VMEM scratch slab for concatenated head outputs
    *,
    n_head: int,
):
    Bt, T, C = x_ref.shape
    hs = C // n_head
    M = Bt * T

    x = x_ref[...].astype(jnp.float32)            # residual path in f32
    x2 = x.reshape(M, C)                          # fold batch into MXU M dim
    xb = x2.astype(jnp.bfloat16)

    # ---- fused QKV projections: lane-dense (M,C)x(C,C) MXU matmuls ----
    q = jnp.dot(xb, wq_ref[...], preferred_element_type=jnp.float32)
    k = jnp.dot(xb, wk_ref[...], preferred_element_type=jnp.float32)
    v = jnp.dot(xb, wv_ref[...], preferred_element_type=jnp.float32)

    q3 = q.reshape(Bt, T, C).astype(jnp.bfloat16)
    k3 = k.reshape(Bt, T, C).astype(jnp.bfloat16)
    v3 = v.reshape(Bt, T, C).astype(jnp.bfloat16)

    bias = bias_ref[...]                          # (T, T) f32, shared by all heads

    # ---- per-head attention; commit each head's output straight to the slab ----
    # n_head is tiny (static unroll); every iteration's intermediates die at the
    # slab store, so live ranges stay bounded without a concat at the end.
    for h in range(n_head):
        lo = h * hs
        qh = q3[:, :, lo:lo + hs]                 # (Bt, T, hs) bf16
        kh = k3[:, :, lo:lo + hs]
        vh = v3[:, :, lo:lo + hs]
        s = jnp.einsum('bqd,bkd->bqk', qh, kh,
                       preferred_element_type=jnp.float32)       # (Bt, T, T) f32
        s = s + bias
        s = s - jnp.max(s, axis=-1, keepdims=True)
        # TODO(synk): on v6e/v7x a bf16 exp (after the f32 max-subtract) halves EUP
        # cost if attention becomes EUP-bound at large T; kept f32 for accuracy.
        p = jnp.exp(s)
        p = p * pl.reciprocal(jnp.sum(p, axis=-1, keepdims=True), approx=True)
        # TODO(synk): attention dropout skipped (inference mode -> identity)
        oh = jnp.einsum('bqk,bkd->bqd', p.astype(jnp.bfloat16), vh,
                        preferred_element_type=jnp.float32)      # (Bt, T, hs) f32
        att_ref[:, lo:lo + hs] = oh.reshape(M, hs)

    # single lane-dense output projection over the slab
    sa = jnp.dot(att_ref[...].astype(jnp.bfloat16), wo_ref[...],
                 preferred_element_type=jnp.float32) + bo_ref[...]
    # TODO(synk): projection dropout skipped (inference mode -> identity)

    # ---- residual + LayerNorm 1 (f32) ----
    h1 = _layernorm(x2 + sa, g1_ref[...], be1_ref[...])
    h1b = h1.astype(jnp.bfloat16)

    # ---- feed-forward: chunk the 4C hidden dim to bound the intermediate ----
    # TODO(synk): for C >= ~1024 on v7x, stream w1/w2 per chunk from HBM
    # (memory_space=pl.ANY + make_async_copy) instead of holding them in VMEM.
    hid = w1_ref.shape[1]
    n_ck = 1
    while hid // n_ck > 2048 and hid % (n_ck * 2) == 0:
        n_ck *= 2
    ck = hid // n_ck
    ff = jnp.zeros((M, C), jnp.float32)
    for j in range(n_ck):                         # static unroll (n_ck == 1 for small C)
        lo = j * ck
        part = jnp.dot(h1b, w1_ref[:, lo:lo + ck],
                       preferred_element_type=jnp.float32)
        part = jnp.maximum(part + bb1_ref[:, lo:lo + ck], 0.0)
        ff = ff + jnp.dot(part.astype(jnp.bfloat16), w2_ref[lo:lo + ck, :],
                          preferred_element_type=jnp.float32)
    ff = ff + bb2_ref[...]
    # TODO(synk): feed-forward dropout skipped (inference mode -> identity)

    # ---- residual + LayerNorm 2 (f32) ----
    out = _layernorm(h1 + ff, g2_ref[...], be2_ref[...])
    o_ref[...] = out.reshape(Bt, T, C).astype(o_ref.dtype)


def _pick_block_b(B, T, target_rows=512):
    """Largest divisor of B with block_b*T <= target_rows and grid length >= 2.

    Keeping the grid >= 2 lets dimension_semantics=("parallel",) use both v7x
    TensorCores; taller M (target_rows 512) amortizes per-grid-step overhead.
    """
    cap = max(1, B // 2)
    best = 1
    for cand in range(1, cap + 1):
        if B % cand == 0 and cand * T <= max(target_rows, T):
            best = cand
    return best


def _vmem_limit_bytes():
    """~78% of physical VMEM: ~50 MiB on v7x (64 MiB/TC), ~100 MiB on v5e/v6e."""
    phys = 128 * 1024 * 1024
    try:
        info = pltpu.get_tpu_info()
        phys = int(getattr(info, "vmem_capacity_bytes", phys)) or phys
    except Exception:
        pass
    return int(phys * 0.78)


def _causal_bias(T):
    row = lax.broadcasted_iota(jnp.int32, (T, T), 0)
    col = lax.broadcasted_iota(jnp.int32, (T, T), 1)
    return jnp.where(row >= col, 0.0, NEG_INF).astype(jnp.float32)


def _cost_estimate(B, T, C, n_head, weights):
    matmul_flops = 2 * B * T * C * C * (3 + 1 + 8)    # qkv + out-proj + ffn
    attn_flops = 4 * B * T * T * C                    # scores + weighted sum
    w_bytes = sum(int(w.size) * w.dtype.itemsize for w in weights)
    io_bytes = 2 * B * T * C * 4
    return pl.CostEstimate(
        flops=int(matmul_flops + attn_flops),
        transcendentals=int(B * n_head * T * T),
        bytes_accessed=int(w_bytes + io_bytes),
    )


def prepare_params(params, n_head):
    """One-time prep: bf16-cast the MXU weights, fold 1/sqrt(hs) into wq.

    Do this ONCE per model (not per forward call) to avoid re-reading the f32
    weights from HBM on every invocation.
    """
    C = params["wq"].shape[0]
    scale = 1.0 / math.sqrt(C // n_head)
    return (
        (params["wq"] * scale).astype(jnp.bfloat16),
        params["wk"].astype(jnp.bfloat16),
        params["wv"].astype(jnp.bfloat16),
        params["wproj"].astype(jnp.bfloat16),
        params["bproj"],
        params["g1"], params["be1"],
        params["w1"].astype(jnp.bfloat16),
        params["bb1"],
        params["w2"].astype(jnp.bfloat16),
        params["bb2"],
        params["g2"], params["be2"],
    )


def block_forward(x, weights, n_head):
    """x: (B, T, C) float32.  weights: tuple from prepare_params()."""
    B, T, C = x.shape
    block_b = _pick_block_b(B, T)
    bias = _causal_bias(T)
    consts = (bias,) + tuple(weights)

    kernel = functools.partial(block_kernel, n_head=n_head)

    # Constant operands use memory-space-only VMEM specs: staged into VMEM once,
    # no per-step re-DMA and no double-buffering (the Buffered(1) effect the
    # review asked for), which is what keeps the kernel inside v7x's 64 MiB VMEM.
    const_specs = [pl.BlockSpec(memory_space=pltpu.MemorySpace.VMEM)
                   for _ in consts]

    return pl.pallas_call(
        kernel,
        out_shape=jax.ShapeDtypeStruct((B, T, C), x.dtype),
        grid_spec=pltpu.PrefetchScalarGridSpec(
            num_scalar_prefetch=0,
            grid=(B // block_b,),
            in_specs=[pl.BlockSpec((block_b, T, C), lambda b: (b, 0, 0))]
                     + const_specs,
            out_specs=pl.BlockSpec((block_b, T, C), lambda b: (b, 0, 0)),
            scratch_shapes=[pltpu.VMEM((block_b * T, C), jnp.float32)],
        ),
        compiler_params=pltpu.CompilerParams(
            dimension_semantics=("parallel",),
            vmem_limit_bytes=_vmem_limit_bytes(),
        ),
        cost_estimate=_cost_estimate(B, T, C, n_head, weights),
    )(x, *consts)


def init_params(key, n_embd):
    C = n_embd
    ks = jax.random.split(key, 8)
    s = 0.02
    return {
        # fused per-head projections stored (in, H*hs) == (C, C)
        "wq": s * jax.random.normal(ks[0], (C, C), jnp.float32),
        "wk": s * jax.random.normal(ks[1], (C, C), jnp.float32),
        "wv": s * jax.random.normal(ks[2], (C, C), jnp.float32),
        "wproj": s * jax.random.normal(ks[3], (C, C), jnp.float32),
        "bproj": s * jax.random.normal(ks[4], (1, C), jnp.float32),
        "g1": jnp.ones((1, C), jnp.float32),
        "be1": jnp.zeros((1, C), jnp.float32),
        "w1": s * jax.random.normal(ks[5], (C, 4 * C), jnp.float32),
        "bb1": s * jax.random.normal(ks[6], (1, 4 * C), jnp.float32),
        "w2": s * jax.random.normal(ks[7], (4 * C, C), jnp.float32),
        "bb2": jnp.zeros((1, C), jnp.float32),
        "g2": jnp.ones((1, C), jnp.float32),
        "be2": jnp.zeros((1, C), jnp.float32),
    }


def block_reference(x, p, n_head):
    """Pure-JAX f32 reference of the PyTorch Block forward (dropout = identity)."""
    B, T, C = x.shape
    hs = C // n_head
    causal = jnp.tril(jnp.ones((T, T), bool))
    q = x @ p["wq"]
    k = x @ p["wk"]
    v = x @ p["wv"]
    outs = []
    for h in range(n_head):
        sl = slice(h * hs, (h + 1) * hs)
        wei = (q[..., sl] @ jnp.swapaxes(k[..., sl], -1, -2)) * (hs ** -0.5)
        wei = jnp.where(causal, wei, -jnp.inf)
        wei = jax.nn.softmax(wei, axis=-1)
        outs.append(wei @ v[..., sl])
    sa = jnp.concatenate(outs, axis=-1) @ p["wproj"] + p["bproj"][0]

    def ln(z, g, b):
        mu = z.mean(-1, keepdims=True)
        var = ((z - mu) ** 2).mean(-1, keepdims=True)
        return (z - mu) / jnp.sqrt(var + LN_EPS) * g[0] + b[0]

    h1 = ln(x + sa, p["g1"], p["be1"])
    ff = jnp.maximum(h1 @ p["w1"] + p["bb1"][0], 0.0) @ p["w2"] + p["bb2"][0]
    return ln(h1 + ff, p["g2"], p["be2"])


if __name__ == "__main__":
    # small shapes consistent with the module: (B, T, n_embd), n_head heads
    B, T, n_embd, n_head = 2, 8, 128, 4

    key = jax.random.PRNGKey(0)
    kx, kp = jax.random.split(key)
    x = jax.random.normal(kx, (B, T, n_embd), jnp.float32)
    params = init_params(kp, n_embd)
    weights = prepare_params(params, n_head)      # bf16 cast + scale fold, done once

    out = jax.block_until_ready(block_forward(x, weights, n_head))
    ref = block_reference(x, params, n_head)

    assert out.shape == (B, T, n_embd)
    max_err = float(jnp.max(jnp.abs(out - ref)))
    # bf16 MXU operands -> compare against f32 reference with loosened tolerance
    assert jnp.allclose(out, ref, atol=2e-2, rtol=2e-2), max_err
    print("KERNEL_OK")
</pallas_src>

<mosaic_0001>
module attributes {stable_mosaic.version = 11 : i64} {
  func.func @block_kernel(%arg0: i32, %arg1: memref<1x8x128xf32, #tpu.memory_space<vmem>>, %arg2: memref<8x8xf32, #tpu.memory_space<vmem>>, %arg3: memref<128x128xbf16, #tpu.memory_space<vmem>>, %arg4: memref<128x128xbf16, #tpu.memory_space<vmem>>, %arg5: memref<128x128xbf16, #tpu.memory_space<vmem>>, %arg6: memref<128x128xbf16, #tpu.memory_space<vmem>>, %arg7: memref<1x128xf32, #tpu.memory_space<vmem>>, %arg8: memref<1x128xf32, #tpu.memory_space<vmem>>, %arg9: memref<1x128xf32, #tpu.memory_space<vmem>>, %arg10: memref<128x512xbf16, #tpu.memory_space<vmem>>, %arg11: memref<1x512xf32, #tpu.memory_space<vmem>>, %arg12: memref<512x128xbf16, #tpu.memory_space<vmem>>, %arg13: memref<1x128xf32, #tpu.memory_space<vmem>>, %arg14: memref<1x128xf32, #tpu.memory_space<vmem>>, %arg15: memref<1x128xf32, #tpu.memory_space<vmem>>, %arg16: memref<1x8x128xf32, #tpu.memory_space<vmem>>, %arg17: memref<8x128xf32, #tpu.memory_space<vmem>>) attributes {dimension_semantics = [#tpu.dimension_semantics<parallel>], iteration_bounds = array<i64: 2>, scalar_prefetch = 0 : i64, scratch_operands = 1 : i64, tpu.core_type = #tpu.core_type<tc>, window_params = [{transform_indices = @transform_0, window_bounds = array<i64: 1, 8, 128>}, {pipeline_mode = #tpu.pipeline_mode<synchronous>, transform_indices = @transform_1, window_bounds = array<i64: 8, 8>}, {pipeline_mode = #tpu.pipeline_mode<synchronous>, transform_indices = @transform_2, window_bounds = array<i64: 128, 128>}, {pipeline_mode = #tpu.pipeline_mode<synchronous>, transform_indices = @transform_3, window_bounds = array<i64: 128, 128>}, {pipeline_mode = #tpu.pipeline_mode<synchronous>, transform_indices = @transform_4, window_bounds = array<i64: 128, 128>}, {pipeline_mode = #tpu.pipeline_mode<synchronous>, transform_indices = @transform_5, window_bounds = array<i64: 128, 128>}, {pipeline_mode = #tpu.pipeline_mode<synchronous>, transform_indices = @transform_6, window_bounds = array<i64: 1, 128>}, {pipeline_mode = #tpu.pipeline_mode<synchronous>, transform_indices = @transform_7, window_bounds = array<i64: 1, 128>}, {pipeline_mode = #tpu.pipeline_mode<synchronous>, transform_indices = @transform_8, window_bounds = array<i64: 1, 128>}, {pipeline_mode = #tpu.pipeline_mode<synchronous>, transform_indices = @transform_9, window_bounds = array<i64: 128, 512>}, {pipeline_mode = #tpu.pipeline_mode<synchronous>, transform_indices = @transform_10, window_bounds = array<i64: 1, 512>}, {pipeline_mode = #tpu.pipeline_mode<synchronous>, transform_indices = @transform_11, window_bounds = array<i64: 512, 128>}, {pipeline_mode = #tpu.pipeline_mode<synchronous>, transform_indices = @transform_12, window_bounds = array<i64: 1, 128>}, {pipeline_mode = #tpu.pipeline_mode<synchronous>, transform_indices = @transform_13, window_bounds = array<i64: 1, 128>}, {pipeline_mode = #tpu.pipeline_mode<synchronous>, transform_indices = @transform_14, window_bounds = array<i64: 1, 128>}, {transform_indices = @transform_15, window_bounds = array<i64: 1, 8, 128>}]} {
    %c0 = arith.constant 0 : index
    %c0_0 = arith.constant 0 : index
    %c0_1 = arith.constant 0 : index
    %0 = vector.load %arg1[%c0, %c0_0, %c0_1] : memref<1x8x128xf32, #tpu.memory_space<vmem>>, vector<1x8x128xf32>
    %1 = vector.shape_cast %0 : vector<1x8x128xf32> to vector<8x128xf32>
    %2 = arith.truncf %1 : vector<8x128xf32> to vector<8x128xbf16>
    %c0_2 = arith.constant 0 : index
    %c0_3 = arith.constant 0 : index
    %3 = vector.load %arg3[%c0_2, %c0_3] : memref<128x128xbf16, #tpu.memory_space<vmem>>, vector<128x128xbf16>
    %cst = arith.constant dense<0.000000e+00> : vector<8x128xf32>
    %4 = tpu.matmul %2, %3, %cst {dimension_numbers = #tpu.dot_dimension_numbers<[1], [0], [0], [1], [0, 0, 1, 1], [], []>} : vector<8x128xbf16>, vector<128x128xbf16>, vector<8x128xf32> -> vector<8x128xf32>
    %c0_4 = arith.constant 0 : index
    %c0_5 = arith.constant 0 : index
    %5 = vector.load %arg4[%c0_4, %c0_5] : memref<128x128xbf16, #tpu.memory_space<vmem>>, vector<128x128xbf16>
    %cst_6 = arith.constant dense<0.000000e+00> : vector<8x128xf32>
    %6 = tpu.matmul %2, %5, %cst_6 {dimension_numbers = #tpu.dot_dimension_numbers<[1], [0], [0], [1], [0, 0, 1, 1], [], []>} : vector<8x128xbf16>, vector<128x128xbf16>, vector<8x128xf32> -> vector<8x128xf32>
    %c0_7 = arith.constant 0 : index
    %c0_8 = arith.constant 0 : index
    %7 = vector.load %arg5[%c0_7, %c0_8] : memref<128x128xbf16, #tpu.memory_space<vmem>>, vector<128x128xbf16>
    %cst_9 = arith.constant dense<0.000000e+00> : vector<8x128xf32>
    %8 = tpu.matmul %2, %7, %cst_9 {dimension_numbers = #tpu.dot_dimension_numbers<[1], [0], [0], [1], [0, 0, 1, 1], [], []>} : vector<8x128xbf16>, vector<128x128xbf16>, vector<8x128xf32> -> vector<8x128xf32>
    %9 = vector.shape_cast %4 : vector<8x128xf32> to vector<1x8x128xf32>
    %10 = arith.truncf %9 : vector<1x8x128xf32> to vector<1x8x128xbf16>
    %11 = vector.shape_cast %6 : vector<8x128xf32> to vector<1x8x128xf32>
    %12 = arith.truncf %11 : vector<1x8x128xf32> to vector<1x8x128xbf16>
    %13 = vector.shape_cast %8 : vector<8x128xf32> to vector<1x8x128xf32>
    %14 = arith.truncf %13 : vector<1x8x128xf32> to vector<1x8x128xbf16>
    %c0_10 = arith.constant 0 : index
    %c0_11 = arith.constant 0 : index
    %15 = vector.load %arg2[%c0_10, %c0_11] : memref<8x8xf32, #tpu.memory_space<vmem>>, vector<8x8xf32>
    %16 = vector.extract_strided_slice %10 {offsets = [0, 0, 0], sizes = [1, 8, 32], strides = [1, 1, 1]} : vector<1x8x128xbf16> to vector<1x8x32xbf16>
    %17 = vector.extract_strided_slice %12 {offsets = [0, 0, 0], sizes = [1, 8, 32], strides = [1, 1, 1]} : vector<1x8x128xbf16> to vector<1x8x32xbf16>
    %18 = vector.extract_strided_slice %14 {offsets = [0, 0, 0], sizes = [1, 8, 32], strides = [1, 1, 1]} : vector<1x8x128xbf16> to vector<1x8x32xbf16>
    "tpu.trace_start"() <{level = 10 : i32, message = "bqd,bkd->bqk"}> : () -> ()
    %cst_12 = arith.constant dense<0.000000e+00> : vector<1x8x8xf32>
    %19 = tpu.matmul %16, %17, %cst_12 {dimension_numbers = #tpu.dot_dimension_numbers<[2], [2], [1], [1], [0, 0, 0, 1, 1, 1], [0], [0]>} : vector<1x8x32xbf16>, vector<1x8x32xbf16>, vector<1x8x8xf32> -> vector<1x8x8xf32>
    "tpu.trace_stop"() : () -> ()
    %20 = vector.shape_cast %15 : vector<8x8xf32> to vector<1x8x8xf32>
    %21 = arith.addf %19, %20 : vector<1x8x8xf32>
    %cst_13 = arith.constant dense<0xFF800000> : vector<1x8xf32>
    %22 = vector.multi_reduction <maximumf>, %21, %cst_13 [2] : vector<1x8x8xf32> to vector<1x8xf32>
    %23 = vector.shape_cast %22 : vector<1x8xf32> to vector<1x8x1xf32>
    %24 = vector.broadcast %23 : vector<1x8x1xf32> to vector<1x8x8xf32>
    %25 = arith.subf %21, %24 : vector<1x8x8xf32>
    %26 = math.exp %25 : vector<1x8x8xf32>
    %cst_14 = arith.constant dense<0.000000e+00> : vector<1x8xf32>
    %27 = vector.multi_reduction <add>, %26, %cst_14 [2] : vector<1x8x8xf32> to vector<1x8xf32>
    %28 = vector.shape_cast %27 : vector<1x8xf32> to vector<1x8x1xf32>
    %29 = tpu.reciprocal %28 {approx = true} : vector<1x8x1xf32> -> vector<1x8x1xf32>
    %30 = vector.broadcast %29 : vector<1x8x1xf32> to vector<1x8x8xf32>
    %31 = arith.mulf %26, %30 : vector<1x8x8xf32>
    %32 = arith.truncf %31 : vector<1x8x8xf32> to vector<1x8x8xbf16>
    "tpu.trace_start"() <{level = 10 : i32, message = "bqk,bkd->bqd"}> : () -> ()
    %cst_15 = arith.constant dense<0.000000e+00> : vector<1x8x32xf32>
    %33 = tpu.matmul %32, %18, %cst_15 {dimension_numbers = #tpu.dot_dimension_numbers<[2], [1], [1], [2], [0, 0, 0, 1, 1, 2], [0], [0]>} : vector<1x8x8xbf16>, vector<1x8x32xbf16>, vector<1x8x32xf32> -> vector<1x8x32xf32>
    "tpu.trace_stop"() : () -> ()
    %34 = vector.shape_cast %33 : vector<1x8x32xf32> to vector<8x32xf32>
    %c0_16 = arith.constant 0 : index
    %c0_17 = arith.constant 0 : index
    %35 = vector.load %arg17[%c0_16, %c0_17] : memref<8x128xf32, #tpu.memory_space<vmem>>, vector<8x32xf32>
    tpu.vector_store %arg17[%c0_16, %c0_17], %34 {strides = array<i32>} : memref<8x128xf32, #tpu.memory_space<vmem>>, vector<8x32xf32>,
    %36 = vector.extract_strided_slice %10 {offsets = [0, 0, 32], sizes = [1, 8, 32], strides = [1, 1, 1]} : vector<1x8x128xbf16> to vector<1x8x32xbf16>
    %37 = vector.extract_strided_slice %12 {offsets = [0, 0, 32], sizes = [1, 8, 32], strides = [1, 1, 1]} : vector<1x8x128xbf16> to vector<1x8x32xbf16>
    %38 = vector.extract_strided_slice %14 {offsets = [0, 0, 32], sizes = [1, 8, 32], strides = [1, 1, 1]} : vector<1x8x128xbf16> to vector<1x8x32xbf16>
    "tpu.trace_start"() <{level = 10 : i32, message = "bqd,bkd->bqk"}> : () -> ()
    %cst_18 = arith.constant dense<0.000000e+00> : vector<1x8x8xf32>
    %39 = tpu.matmul %36, %37, %cst_18 {dimension_numbers = #tpu.dot_dimension_numbers<[2], [2], [1], [1], [0, 0, 0, 1, 1, 1], [0], [0]>} : vector<1x8x32xbf16>, vector<1x8x32xbf16>, vector<1x8x8xf32> -> vector<1x8x8xf32>
    "tpu.trace_stop"() : () -> ()
    %40 = vector.shape_cast %15 : vector<8x8xf32> to vector<1x8x8xf32>
    %41 = arith.addf %39, %40 : vector<1x8x8xf32>
    %cst_19 = arith.constant dense<0xFF800000> : vector<1x8xf32>
    %42 = vector.multi_reduction <maximumf>, %41, %cst_19 [2] : vector<1x8x8xf32> to vector<1x8xf32>
    %43 = vector.shape_cast %42 : vector<1x8xf32> to vector<1x8x1xf32>
    %44 = vector.broadcast %43 : vector<1x8x1xf32> to vector<1x8x8xf32>
    %45 = arith.subf %41, %44 : vector<1x8x8xf32>
    %46 = math.exp %45 : vector<1x8x8xf32>
    %cst_20 = arith.constant dense<0.000000e+00> : vector<1x8xf32>
    %47 = vector.multi_reduction <add>, %46, %cst_20 [2] : vector<1x8x8xf32> to vector<1x8xf32>
    %48 = vector.shape_cast %47 : vector<1x8xf32> to vector<1x8x1xf32>
    %49 = tpu.reciprocal %48 {approx = true} : vector<1x8x1xf32> -> vector<1x8x1xf32>
    %50 = vector.broadcast %49 : vector<1x8x1xf32> to vector<1x8x8xf32>
    %51 = arith.mulf %46, %50 : vector<1x8x8xf32>
    %52 = arith.truncf %51 : vector<1x8x8xf32> to vector<1x8x8xbf16>
    "tpu.trace_start"() <{level = 10 : i32, message = "bqk,bkd->bqd"}> : () -> ()
    %cst_21 = arith.constant dense<0.000000e+00> : vector<1x8x32xf32>
    %53 = tpu.matmul %52, %38, %cst_21 {dimension_numbers = #tpu.dot_dimension_numbers<[2], [1], [1], [2], [0, 0, 0, 1, 1, 2], [0], [0]>} : vector<1x8x8xbf16>, vector<1x8x32xbf16>, vector<1x8x32xf32> -> vector<1x8x32xf32>
    "tpu.trace_stop"() : () -> ()
    %54 = vector.shape_cast %53 : vector<1x8x32xf32> to vector<8x32xf32>
    %c0_22 = arith.constant 0 : index
    %c32 = arith.constant 32 : index
    %55 = vector.load %arg17[%c0_22, %c32] : memref<8x128xf32, #tpu.memory_space<vmem>>, vector<8x32xf32>
    tpu.vector_store %arg17[%c0_22, %c32], %54 {strides = array<i32>} : memref<8x128xf32, #tpu.memory_space<vmem>>, vector<8x32xf32>,
    %56 = vector.extract_strided_slice %10 {offsets = [0, 0, 64], sizes = [1, 8, 32], strides = [1, 1, 1]} : vector<1x8x128xbf16> to vector<1x8x32xbf16>
    %57 = vector.extract_strided_slice %12 {offsets = [0, 0, 64], sizes = [1, 8, 32], strides = [1, 1, 1]} : vector<1x8x128xbf16> to vector<1x8x32xbf16>
    %58 = vector.extract_strided_slice %14 {offsets = [0, 0, 64], sizes = [1, 8, 32], strides = [1, 1, 1]} : vector<1x8x128xbf16> to vector<1x8x32xbf16>
    "tpu.trace_start"() <{level = 10 : i32, message = "bqd,bkd->bqk"}> : () -> ()
    %cst_23 = arith.constant dense<0.000000e+00> : vector<1x8x8xf32>
    %59 = tpu.matmul %56, %57, %cst_23 {dimension_numbers = #tpu.dot_dimension_numbers<[2], [2], [1], [1], [0, 0, 0, 1, 1, 1], [0], [0]>} : vector<1x8x32xbf16>, vector<1x8x32xbf16>, vector<1x8x8xf32> -> vector<1x8x8xf32>
    "tpu.trace_stop"() : () -> ()
    %60 = vector.shape_cast %15 : vector<8x8xf32> to vector<1x8x8xf32>
    %61 = arith.addf %59, %60 : vector<1x8x8xf32>
    %cst_24 = arith.constant dense<0xFF800000> : vector<1x8xf32>
    %62 = vector.multi_reduction <maximumf>, %61, %cst_24 [2] : vector<1x8x8xf32> to vector<1x8xf32>
    %63 = vector.shape_cast %62 : vector<1x8xf32> to vector<1x8x1xf32>
    %64 = vector.broadcast %63 : vector<1x8x1xf32> to vector<1x8x8xf32>
    %65 = arith.subf %61, %64 : vector<1x8x8xf32>
    %66 = math.exp %65 : vector<1x8x8xf32>
    %cst_25 = arith.constant dense<0.000000e+00> : vector<1x8xf32>
    %67 = vector.multi_reduction <add>, %66, %cst_25 [2] : vector<1x8x8xf32> to vector<1x8xf32>
    %68 = vector.shape_cast %67 : vector<1x8xf32> to vector<1x8x1xf32>
    %69 = tpu.reciprocal %68 {approx = true} : vector<1x8x1xf32> -> vector<1x8x1xf32>
    %70 = vector.broadcast %69 : vector<1x8x1xf32> to vector<1x8x8xf32>
    %71 = arith.mulf %66, %70 : vector<1x8x8xf32>
    %72 = arith.truncf %71 : vector<1x8x8xf32> to vector<1x8x8xbf16>
    "tpu.trace_start"() <{level = 10 : i32, message = "bqk,bkd->bqd"}> : () -> ()
    %cst_26 = arith.constant dense<0.000000e+00> : vector<1x8x32xf32>
    %73 = tpu.matmul %72, %58, %cst_26 {dimension_numbers = #tpu.dot_dimension_numbers<[2], [1], [1], [2], [0, 0, 0, 1, 1, 2], [0], [0]>} : vector<1x8x8xbf16>, vector<1x8x32xbf16>, vector<1x8x32xf32> -> vector<1x8x32xf32>
    "tpu.trace_stop"() : () -> ()
    %74 = vector.shape_cast %73 : vector<1x8x32xf32> to vector<8x32xf32>
    %c0_27 = arith.constant 0 : index
    %c64 = arith.constant 64 : index
    %75 = vector.load %arg17[%c0_27, %c64] : memref<8x128xf32, #tpu.memory_space<vmem>>, vector<8x32xf32>
    tpu.vector_store %arg17[%c0_27, %c64], %74 {strides = array<i32>} : memref<8x128xf32, #tpu.memory_space<vmem>>, vector<8x32xf32>,
    %76 = vector.extract_strided_slice %10 {offsets = [0, 0, 96], sizes = [1, 8, 32], strides = [1, 1, 1]} : vector<1x8x128xbf16> to vector<1x8x32xbf16>
    %77 = vector.extract_strided_slice %12 {offsets = [0, 0, 96], sizes = [1, 8, 32], strides = [1, 1, 1]} : vector<1x8x128xbf16> to vector<1x8x32xbf16>
    %78 = vector.extract_strided_slice %14 {offsets = [0, 0, 96], sizes = [1, 8, 32], strides = [1, 1, 1]} : vector<1x8x128xbf16> to vector<1x8x32xbf16>
    "tpu.trace_start"() <{level = 10 : i32, message = "bqd,bkd->bqk"}> : () -> ()
    %cst_28 = arith.constant dense<0.000000e+00> : vector<1x8x8xf32>
    %79 = tpu.matmul %76, %77, %cst_28 {dimension_numbers = #tpu.dot_dimension_numbers<[2], [2], [1], [1], [0, 0, 0, 1, 1, 1], [0], [0]>} : vector<1x8x32xbf16>, vector<1x8x32xbf16>, vector<1x8x8xf32> -> vector<1x8x8xf32>
    "tpu.trace_stop"() : () -> ()
    %80 = vector.shape_cast %15 : vector<8x8xf32> to vector<1x8x8xf32>
    %81 = arith.addf %79, %80 : vector<1x8x8xf32>
    %cst_29 = arith.constant dense<0xFF800000> : vector<1x8xf32>
    %82 = vector.multi_reduction <maximumf>, %81, %cst_29 [2] : vector<1x8x8xf32> to vector<1x8xf32>
    %83 = vector.shape_cast %82 : vector<1x8xf32> to vector<1x8x1xf32>
    %84 = vector.broadcast %83 : vector<1x8x1xf32> to vector<1x8x8xf32>
    %85 = arith.subf %81, %84 : vector<1x8x8xf32>
    %86 = math.exp %85 : vector<1x8x8xf32>
    %cst_30 = arith.constant dense<0.000000e+00> : vector<1x8xf32>
    %87 = vector.multi_reduction <add>, %86, %cst_30 [2] : vector<1x8x8xf32> to vector<1x8xf32>
    %88 = vector.shape_cast %87 : vector<1x8xf32> to vector<1x8x1xf32>
    %89 = tpu.reciprocal %88 {approx = true} : vector<1x8x1xf32> -> vector<1x8x1xf32>
    %90 = vector.broadcast %89 : vector<1x8x1xf32> to vector<1x8x8xf32>
    %91 = arith.mulf %86, %90 : vector<1x8x8xf32>
    %92 = arith.truncf %91 : vector<1x8x8xf32> to vector<1x8x8xbf16>
    "tpu.trace_start"() <{level = 10 : i32, message = "bqk,bkd->bqd"}> : () -> ()
    %cst_31 = arith.constant dense<0.000000e+00> : vector<1x8x32xf32>
    %93 = tpu.matmul %92, %78, %cst_31 {dimension_numbers = #tpu.dot_dimension_numbers<[2], [1], [1], [2], [0, 0, 0, 1, 1, 2], [0], [0]>} : vector<1x8x8xbf16>, vector<1x8x32xbf16>, vector<1x8x32xf32> -> vector<1x8x32xf32>
    "tpu.trace_stop"() : () -> ()
    %94 = vector.shape_cast %93 : vector<1x8x32xf32> to vector<8x32xf32>
    %c0_32 = arith.constant 0 : index
    %c96 = arith.constant 96 : index
    %95 = vector.load %arg17[%c0_32, %c96] : memref<8x128xf32, #tpu.memory_space<vmem>>, vector<8x32xf32>
    tpu.vector_store %arg17[%c0_32, %c96], %94 {strides = array<i32>} : memref<8x128xf32, #tpu.memory_space<vmem>>, vector<8x32xf32>,
    %c0_33 = arith.constant 0 : index
    %c0_34 = arith.constant 0 : index
    %96 = vector.load %arg17[%c0_33, %c0_34] : memref<8x128xf32, #tpu.memory_space<vmem>>, vector<8x128xf32>
    %97 = arith.truncf %96 : vector<8x128xf32> to vector<8x128xbf16>
    %c0_35 = arith.constant 0 : index
    %c0_36 = arith.constant 0 : index
    %98 = vector.load %arg6[%c0_35, %c0_36] : memref<128x128xbf16, #tpu.memory_space<vmem>>, vector<128x128xbf16>
    %cst_37 = arith.constant dense<0.000000e+00> : vector<8x128xf32>
    %99 = tpu.matmul %97, %98, %cst_37 {dimension_numbers = #tpu.dot_dimension_numbers<[1], [0], [0], [1], [0, 0, 1, 1], [], []>} : vector<8x128xbf16>, vector<128x128xbf16>, vector<8x128xf32> -> vector<8x128xf32>
    %c0_38 = arith.constant 0 : index
    %c0_39 = arith.constant 0 : index
    %100 = vector.load %arg7[%c0_38, %c0_39] : memref<1x128xf32, #tpu.memory_space<vmem>>, vector<1x128xf32>
    %101 = vector.broadcast %100 : vector<1x128xf32> to vector<8x128xf32>
    %102 = arith.addf %99, %101 : vector<8x128xf32>
    %103 = arith.addf %1, %102 : vector<8x128xf32>
    %c0_40 = arith.constant 0 : index
    %c0_41 = arith.constant 0 : index
    %104 = vector.load %arg8[%c0_40, %c0_41] : memref<1x128xf32, #tpu.memory_space<vmem>>, vector<1x128xf32>
    %c0_42 = arith.constant 0 : index
    %c0_43 = arith.constant 0 : index
    %105 = vector.load %arg9[%c0_42, %c0_43] : memref<1x128xf32, #tpu.memory_space<vmem>>, vector<1x128xf32>
    %cst_44 = arith.constant dense<0.000000e+00> : vector<8xf32>
    %106 = vector.multi_reduction <add>, %103, %cst_44 [1] : vector<8x128xf32> to vector<8xf32>
    %107 = vector.shape_cast %106 : vector<8xf32> to vector<8x1xf32>
    %cst_45 = arith.constant 1.280000e+02 : f32
    %108 = vector.broadcast %cst_45 : f32 to vector<8x1xf32>
    %109 = arith.divf %107, %108 : vector<8x1xf32>
    %110 = vector.broadcast %109 : vector<8x1xf32> to vector<8x128xf32>
    %111 = arith.subf %103, %110 : vector<8x128xf32>
    %112 = arith.mulf %111, %111 : vector<8x128xf32>
    %cst_46 = arith.constant dense<0.000000e+00> : vector<8xf32>
    %113 = vector.multi_reduction <add>, %112, %cst_46 [1] : vector<8x128xf32> to vector<8xf32>
    %114 = vector.shape_cast %113 : vector<8xf32> to vector<8x1xf32>
    %cst_47 = arith.constant 1.280000e+02 : f32
    %115 = vector.broadcast %cst_47 : f32 to vector<8x1xf32>
    %116 = arith.divf %114, %115 : vector<8x1xf32>
    %117 = vector.broadcast %109 : vector<8x1xf32> to vector<8x128xf32>
    %118 = arith.subf %103, %117 : vector<8x128xf32>
    %cst_48 = arith.constant 9.99999974E-6 : f32
    %119 = vector.broadcast %cst_48 : f32 to vector<8x1xf32>
    %120 = arith.addf %116, %119 : vector<8x1xf32>
    %121 = math.rsqrt %120 : vector<8x1xf32>
    %122 = vector.broadcast %121 : vector<8x1xf32> to vector<8x128xf32>
    %123 = arith.mulf %118, %122 : vector<8x128xf32>
    %124 = vector.broadcast %104 : vector<1x128xf32> to vector<8x128xf32>
    %125 = arith.mulf %123, %124 : vector<8x128xf32>
    %126 = vector.broadcast %105 : vector<1x128xf32> to vector<8x128xf32>
    %127 = arith.addf %125, %126 : vector<8x128xf32>
    %128 = arith.truncf %127 : vector<8x128xf32> to vector<8x128xbf16>
    %cst_49 = arith.constant 0.000000e+00 : f32
    %129 = vector.broadcast %cst_49 : f32 to vector<8x128xf32>
    %c0_50 = arith.constant 0 : index
    %c0_51 = arith.constant 0 : index
    %130 = vector.load %arg10[%c0_50, %c0_51] : memref<128x512xbf16, #tpu.memory_space<vmem>>, vector<128x512xbf16>
    %cst_52 = arith.constant dense<0.000000e+00> : vector<8x512xf32>
    %131 = tpu.matmul %128, %130, %cst_52 {dimension_numbers = #tpu.dot_dimension_numbers<[1], [0], [0], [1], [0, 0, 1, 1], [], []>} : vector<8x128xbf16>, vector<128x512xbf16>, vector<8x512xf32> -> vector<8x512xf32>
    %c0_53 = arith.constant 0 : index
    %c0_54 = arith.constant 0 : index
    %132 = vector.load %arg11[%c0_53, %c0_54] : memref<1x512xf32, #tpu.memory_space<vmem>>, vector<1x512xf32>
    %133 = vector.broadcast %132 : vector<1x512xf32> to vector<8x512xf32>
    %134 = arith.addf %131, %133 : vector<8x512xf32>
    %cst_55 = arith.constant 0.000000e+00 : f32
    %135 = vector.broadcast %cst_55 : f32 to vector<8x512xf32>
    %136 = arith.maximumf %134, %135 : vector<8x512xf32>
    %137 = arith.truncf %136 : vector<8x512xf32> to vector<8x512xbf16>
    %c0_56 = arith.constant 0 : index
    %c0_57 = arith.constant 0 : index
    %138 = vector.load %arg12[%c0_56, %c0_57] : memref<512x128xbf16, #tpu.memory_space<vmem>>, vector<512x128xbf16>
    %cst_58 = arith.constant dense<0.000000e+00> : vector<8x128xf32>
    %139 = tpu.matmul %137, %138, %cst_58 {dimension_numbers = #tpu.dot_dimension_numbers<[1], [0], [0], [1], [0, 0, 1, 1], [], []>} : vector<8x512xbf16>, vector<512x128xbf16>, vector<8x128xf32> -> vector<8x128xf32>
    %140 = arith.addf %129, %139 : vector<8x128xf32>
    %c0_59 = arith.constant 0 : index
    %c0_60 = arith.constant 0 : index
    %141 = vector.load %arg13[%c0_59, %c0_60] : memref<1x128xf32, #tpu.memory_space<vmem>>, vector<1x128xf32>
    %142 = vector.broadcast %141 : vector<1x128xf32> to vector<8x128xf32>
    %143 = arith.addf %140, %142 : vector<8x128xf32>
    %144 = arith.addf %127, %143 : vector<8x128xf32>
    %c0_61 = arith.constant 0 : index
    %c0_62 = arith.constant 0 : index
    %145 = vector.load %arg14[%c0_61, %c0_62] : memref<1x128xf32, #tpu.memory_space<vmem>>, vector<1x128xf32>
    %c0_63 = arith.constant 0 : index
    %c0_64 = arith.constant 0 : index
    %146 = vector.load %arg15[%c0_63, %c0_64] : memref<1x128xf32, #tpu.memory_space<vmem>>, vector<1x128xf32>
    %cst_65 = arith.constant dense<0.000000e+00> : vector<8xf32>
    %147 = vector.multi_reduction <add>, %144, %cst_65 [1] : vector<8x128xf32> to vector<8xf32>
    %148 = vector.shape_cast %147 : vector<8xf32> to vector<8x1xf32>
    %cst_66 = arith.constant 1.280000e+02 : f32
    %149 = vector.broadcast %cst_66 : f32 to vector<8x1xf32>
    %150 = arith.divf %148, %149 : vector<8x1xf32>
    %151 = vector.broadcast %150 : vector<8x1xf32> to vector<8x128xf32>
    %152 = arith.subf %144, %151 : vector<8x128xf32>
    %153 = arith.mulf %152, %152 : vector<8x128xf32>
    %cst_67 = arith.constant dense<0.000000e+00> : vector<8xf32>
    %154 = vector.multi_reduction <add>, %153, %cst_67 [1] : vector<8x128xf32> to vector<8xf32>
    %155 = vector.shape_cast %154 : vector<8xf32> to vector<8x1xf32>
    %cst_68 = arith.constant 1.280000e+02 : f32
    %156 = vector.broadcast %cst_68 : f32 to vector<8x1xf32>
    %157 = arith.divf %155, %156 : vector<8x1xf32>
    %158 = vector.broadcast %150 : vector<8x1xf32> to vector<8x128xf32>
    %159 = arith.subf %144, %158 : vector<8x128xf32>
    %cst_69 = arith.constant 9.99999974E-6 : f32
    %160 = vector.broadcast %cst_69 : f32 to vector<8x1xf32>
    %161 = arith.addf %157, %160 : vector<8x1xf32>
    %162 = math.rsqrt %161 : vector<8x1xf32>
    %163 = vector.broadcast %162 : vector<8x1xf32> to vector<8x128xf32>
    %164 = arith.mulf %159, %163 : vector<8x128xf32>
    %165 = vector.broadcast %145 : vector<1x128xf32> to vector<8x128xf32>
    %166 = arith.mulf %164, %165 : vector<8x128xf32>
    %167 = vector.broadcast %146 : vector<1x128xf32> to vector<8x128xf32>
    %168 = arith.addf %166, %167 : vector<8x128xf32>
    %169 = vector.shape_cast %168 : vector<8x128xf32> to vector<1x8x128xf32>
    %c0_70 = arith.constant 0 : index
    %c0_71 = arith.constant 0 : index
    %c0_72 = arith.constant 0 : index
    %170 = vector.load %arg16[%c0_70, %c0_71, %c0_72] : memref<1x8x128xf32, #tpu.memory_space<vmem>>, vector<1x8x128xf32>
    tpu.vector_store %arg16[%c0_70, %c0_71, %c0_72], %169 {strides = array<i32>} : memref<1x8x128xf32, #tpu.memory_space<vmem>>, vector<1x8x128xf32>,
    return
  }
  func.func @transform_0(%arg0: i32) -> (i32, i32, i32) {
    %c0_i32 = arith.constant 0 : i32
    %c0_i32_0 = arith.constant 0 : i32
    %c0_i32_1 = arith.constant 0 : i32
    return %arg0, %c0_i32, %c0_i32_0 : i32, i32, i32
  }
  func.func @transform_1(%arg0: i32) -> (i32, i32) {
    %c0_i32 = arith.constant 0 : i32
    %c0_i32_0 = arith.constant 0 : i32
    %c0_i32_1 = arith.constant 0 : i32
    return %c0_i32, %c0_i32_0 : i32, i32
  }
  func.func @transform_2(%arg0: i32) -> (i32, i32) {
    %c0_i32 = arith.constant 0 : i32
    %c0_i32_0 = arith.constant 0 : i32
    %c0_i32_1 = arith.constant 0 : i32
    return %c0_i32, %c0_i32_0 : i32, i32
  }
  func.func @transform_3(%arg0: i32) -> (i32, i32) {
    %c0_i32 = arith.constant 0 : i32
    %c0_i32_0 = arith.constant 0 : i32
    %c0_i32_1 = arith.constant 0 : i32
    return %c0_i32, %c0_i32_0 : i32, i32
  }
  func.func @transform_4(%arg0: i32) -> (i32, i32) {
    %c0_i32 = arith.constant 0 : i32
    %c0_i32_0 = arith.constant 0 : i32
    %c0_i32_1 = arith.constant 0 : i32
    return %c0_i32, %c0_i32_0 : i32, i32
  }
  func.func @transform_5(%arg0: i32) -> (i32, i32) {
    %c0_i32 = arith.constant 0 : i32
    %c0_i32_0 = arith.constant 0 : i32
    %c0_i32_1 = arith.constant 0 : i32
    return %c0_i32, %c0_i32_0 : i32, i32
  }
  func.func @transform_6(%arg0: i32) -> (i32, i32) {
    %c0_i32 = arith.constant 0 : i32
    %c0_i32_0 = arith.constant 0 : i32
    %c0_i32_1 = arith.constant 0 : i32
    return %c0_i32, %c0_i32_0 : i32, i32
  }
  func.func @transform_7(%arg0: i32) -> (i32, i32) {
    %c0_i32 = arith.constant 0 : i32
    %c0_i32_0 = arith.constant 0 : i32
    %c0_i32_1 = arith.constant 0 : i32
    return %c0_i32, %c0_i32_0 : i32, i32
  }
  func.func @transform_8(%arg0: i32) -> (i32, i32) {
    %c0_i32 = arith.constant 0 : i32
    %c0_i32_0 = arith.constant 0 : i32
    %c0_i32_1 = arith.constant 0 : i32
    return %c0_i32, %c0_i32_0 : i32, i32
  }
  func.func @transform_9(%arg0: i32) -> (i32, i32) {
    %c0_i32 = arith.constant 0 : i32
    %c0_i32_0 = arith.constant 0 : i32
    %c0_i32_1 = arith.constant 0 : i32
    return %c0_i32, %c0_i32_0 : i32, i32
  }
  func.func @transform_10(%arg0: i32) -> (i32, i32) {
    %c0_i32 = arith.constant 0 : i32
    %c0_i32_0 = arith.constant 0 : i32
    %c0_i32_1 = arith.constant 0 : i32
    return %c0_i32, %c0_i32_0 : i32, i32
  }
  func.func @transform_11(%arg0: i32) -> (i32, i32) {
    %c0_i32 = arith.constant 0 : i32
    %c0_i32_0 = arith.constant 0 : i32
    %c0_i32_1 = arith.constant 0 : i32
    return %c0_i32, %c0_i32_0 : i32, i32
  }
  func.func @transform_12(%arg0: i32) -> (i32, i32) {
    %c0_i32 = arith.constant 0 : i32
    %c0_i32_0 = arith.constant 0 : i32
    %c0_i32_1 = arith.constant 0 : i32
    return %c0_i32, %c0_i32_0 : i32, i32
  }
  func.func @transform_13(%arg0: i32) -> (i32, i32) {
    %c0_i32 = arith.constant 0 : i32
    %c0_i32_0 = arith.constant 0 : i32
    %c0_i32_1 = arith.constant 0 : i32
    return %c0_i32, %c0_i32_0 : i32, i32
  }
  func.func @transform_14(%arg0: i32) -> (i32, i32) {
    %c0_i32 = arith.constant 0 : i32
    %c0_i32_0 = arith.constant 0 : i32
    %c0_i32_1 = arith.constant 0 : i32
    return %c0_i32, %c0_i32_0 : i32, i32
  }
  func.func @transform_15(%arg0: i32) -> (i32, i32, i32) {
    %c0_i32 = arith.constant 0 : i32
    %c0_i32_0 = arith.constant 0 : i32
    %c0_i32_1 = arith.constant 0 : i32
    return %arg0, %c0_i32, %c0_i32_0 : i32, i32, i32
  }
}

</mosaic_0001>

<llo_original>
// kernel: tpu_custom_call.1
$region0: #{tpu_custom_call.1}
  #allocation0 [shape = 'u32[]', space=smem, size = 0x4, offset = 0x4, fixed_abs, tag = 'smem constant byte address 0x4 - core index']
  #allocation1 [shape = 'u32[144,128]{1,0:T(1,128)}', space=vmem, size = 0x12000, scoped, tag = 'internal scratch']
  #allocation2 [shape = 'f32[8,128]{1,0:T(8,128)}', space=vmem, size = 0x1000, scoped, tag = 'scratch operand']
  %s0 = inlined_call_operand.hbm [shape: f32[2,8,128], index: 0, kind: input, shape index: {}]
  %s1 = inlined_call_operand.hbm [shape: f32[8,8], index: 1, kind: input, shape index: {}]
  %s2 = inlined_call_operand.hbm [shape: bf16[128,128], index: 2, kind: input, shape index: {}]
  %s3 = inlined_call_operand.hbm [shape: bf16[128,128], index: 3, kind: input, shape index: {}]
  %s4 = inlined_call_operand.hbm [shape: bf16[128,128], index: 4, kind: input, shape index: {}]
  %s5 = inlined_call_operand.hbm [shape: bf16[128,128], index: 5, kind: input, shape index: {}]
  %s6 = inlined_call_operand.vmem [shape: f32[1,128], index: 6, kind: input, shape index: {}]
  %s7 = inlined_call_operand.vmem [shape: f32[1,128], index: 7, kind: input, shape index: {}]
  %s8 = inlined_call_operand.vmem [shape: f32[1,128], index: 8, kind: input, shape index: {}]
  %s9 = inlined_call_operand.hbm [shape: bf16[128,512], index: 9, kind: input, shape index: {}]
  %s10 = inlined_call_operand.vmem [shape: f32[1,512], index: 10, kind: input, shape index: {}]
  %s11 = inlined_call_operand.hbm [shape: bf16[512,128], index: 11, kind: input, shape index: {}]
  %s12 = inlined_call_operand.vmem [shape: f32[1,128], index: 12, kind: input, shape index: {}]
  %s13 = inlined_call_operand.vmem [shape: f32[1,128], index: 13, kind: input, shape index: {}]
  %s14 = inlined_call_operand.vmem [shape: f32[1,128], index: 14, kind: input, shape index: {}]
  %s15 = inlined_call_operand.hbm [shape: f32[2,8,128], index: 15, kind: output, shape index: {}]
  %s16 = sld [smem:[#allocation0]]
  $region125: #{tpu_custom_call.1} parent=0
    _
  %s18 = ssub.s32 1, %s16
  %s19 = scalar_select 0, %s18, %s16
  $region1: #{tpu_custom_call.1} parent=0
    #allocation3 [shape = 'u8[8192]{0}', space=vmem, size = 0x2000, scoped, tag = 'input window, operand 0']
    #allocation4 [shape = 's32[2]{0}', space=sflag, size = 0x8, scoped, tag = 'scoped memory for tpu_custom_call.1']
    #allocation5 [shape = 's32[2]{0}', space=sflag, size = 0x8, scoped, tag = 'scoped memory for tpu_custom_call.1']
    #allocation6 [shape = 'u8[4096]{0}', space=vmem, size = 0x1000, scoped, tag = 'input window, operand 1, single buffered']
    #allocation7 [shape = 's32[1]{0}', space=sflag, size = 0x4, scoped, tag = 'scoped memory for tpu_custom_call.1']
    #allocation8 [shape = 'u8[32768]{0}', space=vmem, size = 0x8000, scoped, tag = 'input window, operand 2, single buffered']
    #allocation9 [shape = 'u8[32768]{0}', space=vmem, size = 0x8000, scoped, tag = 'input window, operand 3, single buffered']
    #allocation10 [shape = 's32[1]{0}', space=sflag, size = 0x4, scoped, tag = 'scoped memory for tpu_custom_call.1']
    #allocation11 [shape = 'u8[32768]{0}', space=vmem, size = 0x8000, scoped, tag = 'input window, operand 4, single buffered']
    #allocation12 [shape = 'u8[32768]{0}', space=vmem, size = 0x8000, scoped, tag = 'input window, operand 5, single buffered']
    #allocation13 [shape = 's32[1]{0}', space=sflag, size = 0x4, scoped, tag = 'scoped memory for tpu_custom_call.1']
    #allocation14 [shape = 'u8[131072]{0}', space=vmem, size = 0x20000, scoped, tag = 'input window, operand 9, single buffered']
    #allocation15 [shape = 'u8[131072]{0}', space=vmem, size = 0x20000, scoped, tag = 'input window, operand 11, single buffered']
    #allocation16 [shape = 's32[1]{0}', space=sflag, size = 0x4, scoped, tag = 'scoped memory for tpu_custom_call.1']
    #allocation17 [shape = 'u8[8192]{0}', space=vmem, size = 0x2000, scoped, tag = 'output window, operand 0']
    %20 = vsyncpa [#allocation4], 0
    %s21 = scalar_lea.sflag [#allocation4], 1
    %22 = vsyncpa %s21, 0
    %23 = vsyncpa [#allocation7], 0
    %24 = vsyncpa [#allocation10], 0
    %25 = vsyncpa [#allocation13], 0
    %26 = vsyncpa [#allocation16], 0
    %27 = vsyncpa [#allocation5], 0
    %s28 = scalar_lea.sflag [#allocation5], 1
    %29 = vsyncpa %s28, 0
    loop: start=0, step=1, limit=4
    $region2: #{tpu_custom_call.1} parent=1 // loop_pre_header
      _
    $region3: #{tpu_custom_call.1} parent=1 // loop_header
      %s31 = sphi 0, %s35
      %p32 = scmp.ge.s32.totalorder %s31, 4
      %s41 = sphi 0, %s43
      %s44 = sphi 0, %s41
      %s45 = sphi 0, %s44
      %s61 = sphi 0, %s45
      %s65 = sphi 0, %s65
      %s67 = sphi 0, %s65
      %s68 = sphi 0, %s67
      %s82 = sphi 0, %s68
      %s86 = sphi 0, %s86
      %s88 = sphi 0, %s86
      %s89 = sphi 0, %s88
      %s103 = sphi 0, %s89
      %s107 = sphi 0, %s107
      %s109 = sphi 0, %s107
      %s110 = sphi 0, %s109
      %s124 = sphi 0, %s110
      %s128 = sphi 0, %s128
      %s130 = sphi 0, %s128
      %s131 = sphi 0, %s130
      %s145 = sphi 0, %s131
      %s149 = sphi 0, %s149
      %s151 = sphi 0, %s149
      %s152 = sphi 0, %s151
      %s166 = sphi 0, %s152
      %s170 = sphi 0, %s170
      %s172 = sphi 0, %s170
      %s173 = sphi 0, %s172
      %s187 = sphi 0, %s173
      %s191 = sphi 0, %s191
      %s193 = sphi 0, %s191
      %s194 = sphi 0, %s193
      %s208 = sphi 0, %s194
      %s212 = sphi 0, %s212
      %s214 = sphi 0, %s212
      %s215 = sphi 0, %s214
      %s229 = sphi 0, %s215
      %s233 = sphi 0, %s233
      %s235 = sphi 0, %s233
      %s236 = sphi 0, %s235
      %s250 = sphi 0, %s236
      %s254 = sphi 0, %s254
      %s256 = sphi 0, %s254
      %s257 = sphi 0, %s256
      %s271 = sphi 0, %s257
      %s275 = sphi 0, %s275
      %s277 = sphi 0, %s275
      %s278 = sphi 0, %s277
      %s292 = sphi 0, %s278
      %s296 = sphi 0, %s296
      %s298 = sphi 0, %s296
      %s299 = sphi 0, %s298
      %s313 = sphi 0, %s299
      %s317 = sphi 0, %s317
      %s319 = sphi 0, %s317
      %s320 = sphi 0, %s319
      %s334 = sphi 0, %s320
      %s338 = sphi 0, %s338
      %s340 = sphi 0, %s338
      %s341 = sphi 0, %s340
      %s355 = sphi 0, %s341
      %s361 = sphi 0, %s363
      %s364 = sphi 0, %s361
      %s365 = sphi 0, %s364
      %s381 = sphi 0, %s365
    $region4: #{tpu_custom_call.1} parent=1 // loop_header_branch
      %34 = sbr.rel (%p32) target = $region8
    $region5: #{tpu_custom_call.1} parent=1 // loop_body
      %s36 = ssub.s32 %s31, 1
      %s37 = ssub.s32 %s31, 2
      %s38 = sadd.s32 %s31, 1
      %s39 = ssub.s32 %s31, %s38
      %p40 = scmp.eq.s32.totalorder %s39, 0
      %s42 = sadd.s32 %s41, 1
      %s43 = scalar_select %p40, %s41, %s42
      %p46 = pneg %p40
      %p47 = scmp.eq.s32.totalorder %s31, 1
      %p48 = por %p46, %p47
      %p49 = scmp.ne.s32.totalorder %s41, %s44
      %p50 = scmp.eq.s32.totalorder %s31, 0
      %p51 = por %p49, %p50
      %p52 = scmp.ne.s32.totalorder %s41, %s44
      %p53 = scmp.eq.s32.totalorder %s36, 1
      %p54 = por %p52, %p53
      %p55 = scmp.ne.s32.totalorder %s44, %s45
      %p56 = scmp.eq.s32.totalorder %s36, 0
      %p57 = por %p55, %p56
      %p58 = scmp.ne.s32.totalorder %s44, %s45
      %p59 = scmp.eq.s32.totalorder %s37, 1
      %p60 = por %p58, %p59
      %p62 = scmp.ne.s32.totalorder %s45, %s61
      %p63 = scmp.eq.s32.totalorder %s37, 0
      %p64 = por %p62, %p63
      %s66 = sadd.s32 %s65, 1
      %p69 = scmp.eq.s32.totalorder %s31, 1
      %p70 = scmp.ne.s32.totalorder %s65, %s67
      %p71 = scmp.eq.s32.totalorder %s31, 0
      %p72 = por %p70, %p71
      %p73 = scmp.ne.s32.totalorder %s65, %s67
      %p74 = scmp.eq.s32.totalorder %s36, 1
      %p75 = por %p73, %p74
      %p76 = scmp.ne.s32.totalorder %s67, %s68
      %p77 = scmp.eq.s32.totalorder %s36, 0
      %p78 = por %p76, %p77
      %p79 = scmp.ne.s32.totalorder %s67, %s68
      %p80 = scmp.eq.s32.totalorder %s37, 1
      %p81 = por %p79, %p80
      %p83 = scmp.ne.s32.totalorder %s68, %s82
      %p84 = scmp.eq.s32.totalorder %s37, 0
      %p85 = por %p83, %p84
      %s87 = sadd.s32 %s86, 1
      %p90 = scmp.eq.s32.totalorder %s31, 1
      %p91 = scmp.ne.s32.totalorder %s86, %s88
      %p92 = scmp.eq.s32.totalorder %s31, 0
      %p93 = por %p91, %p92
      %p94 = scmp.ne.s32.totalorder %s86, %s88
      %p95 = scmp.eq.s32.totalorder %s36, 1
      %p96 = por %p94, %p95
      %p97 = scmp.ne.s32.totalorder %s88, %s89
      %p98 = scmp.eq.s32.totalorder %s36, 0
      %p99 = por %p97, %p98
      %p100 = scmp.ne.s32.totalorder %s88, %s89
      %p101 = scmp.eq.s32.totalorder %s37, 1
      %p102 = por %p100, %p101
      %p104 = scmp.ne.s32.totalorder %s89, %s103
      %p105 = scmp.eq.s32.totalorder %s37, 0
      %p106 = por %p104, %p105
      %s108 = sadd.s32 %s107, 1
      %p111 = scmp.eq.s32.totalorder %s31, 1
      %p112 = scmp.ne.s32.totalorder %s107, %s109
      %p113 = scmp.eq.s32.totalorder %s31, 0
      %p114 = por %p112, %p113
      %p115 = scmp.ne.s32.totalorder %s107, %s109
      %p116 = scmp.eq.s32.totalorder %s36, 1
      %p117 = por %p115, %p116
      %p118 = scmp.ne.s32.totalorder %s109, %s110
      %p119 = scmp.eq.s32.totalorder %s36, 0
      %p120 = por %p118, %p119
      %p121 = scmp.ne.s32.totalorder %s109, %s110
      %p122 = scmp.eq.s32.totalorder %s37, 1
      %p123 = por %p121, %p122
      %p125 = scmp.ne.s32.totalorder %s110, %s124
      %p126 = scmp.eq.s32.totalorder %s37, 0
      %p127 = por %p125, %p126
      %s129 = sadd.s32 %s128, 1
      %p132 = scmp.eq.s32.totalorder %s31, 1
      %p133 = scmp.ne.s32.totalorder %s128, %s130
      %p134 = scmp.eq.s32.totalorder %s31, 0
      %p135 = por %p133, %p134
      %p136 = scmp.ne.s32.totalorder %s128, %s130
      %p137 = scmp.eq.s32.totalorder %s36, 1
      %p138 = por %p136, %p137
      %p139 = scmp.ne.s32.totalorder %s130, %s131
      %p140 = scmp.eq.s32.totalorder %s36, 0
      %p141 = por %p139, %p140
      %p142 = scmp.ne.s32.totalorder %s130, %s131
      %p143 = scmp.eq.s32.totalorder %s37, 1
      %p144 = por %p142, %p143
      %p146 = scmp.ne.s32.totalorder %s131, %s145
      %p147 = scmp.eq.s32.totalorder %s37, 0
      %p148 = por %p146, %p147
      %s150 = sadd.s32 %s149, 1
      %p153 = scmp.eq.s32.totalorder %s31, 1
      %p154 = scmp.ne.s32.totalorder %s149, %s151
      %p155 = scmp.eq.s32.totalorder %s31, 0
      %p156 = por %p154, %p155
      %p157 = scmp.ne.s32.totalorder %s149, %s151
      %p158 = scmp.eq.s32.totalorder %s36, 1
      %p159 = por %p157, %p158
      %p160 = scmp.ne.s32.totalorder %s151, %s152
      %p161 = scmp.eq.s32.totalorder %s36, 0
      %p162 = por %p160, %p161
      %p163 = scmp.ne.s32.totalorder %s151, %s152
      %p164 = scmp.eq.s32.totalorder %s37, 1
      %p165 = por %p163, %p164
      %p167 = scmp.ne.s32.totalorder %s152, %s166
      %p168 = scmp.eq.s32.totalorder %s37, 0
      %p169 = por %p167, %p168
      %s171 = sadd.s32 %s170, 1
      %p174 = scmp.eq.s32.totalorder %s31, 1
      %p175 = scmp.ne.s32.totalorder %s170, %s172
      %p176 = scmp.eq.s32.totalorder %s31, 0
      %p177 = por %p175, %p176
      %p178 = scmp.ne.s32.totalorder %s170, %s172
      %p179 = scmp.eq.s32.totalorder %s36, 1
      %p180 = por %p178, %p179
      %p181 = scmp.ne.s32.totalorder %s172, %s173
      %p182 = scmp.eq.s32.totalorder %s36, 0
      %p183 = por %p181, %p182
      %p184 = scmp.ne.s32.totalorder %s172, %s173
      %p185 = scmp.eq.s32.totalorder %s37, 1
      %p186 = por %p184, %p185
      %p188 = scmp.ne.s32.totalorder %s173, %s187
      %p189 = scmp.eq.s32.totalorder %s37, 0
      %p190 = por %p188, %p189
      %s192 = sadd.s32 %s191, 1
      %p195 = scmp.eq.s32.totalorder %s31, 1
      %p196 = scmp.ne.s32.totalorder %s191, %s193
      %p197 = scmp.eq.s32.totalorder %s31, 0
      %p198 = por %p196, %p197
      %p199 = scmp.ne.s32.totalorder %s191, %s193
      %p200 = scmp.eq.s32.totalorder %s36, 1
      %p201 = por %p199, %p200
      %p202 = scmp.ne.s32.totalorder %s193, %s194
      %p203 = scmp.eq.s32.totalorder %s36, 0
      %p204 = por %p202, %p203
      %p205 = scmp.ne.s32.totalorder %s193, %s194
      %p206 = scmp.eq.s32.totalorder %s37, 1
      %p207 = por %p205, %p206
      %p209 = scmp.ne.s32.totalorder %s194, %s208
      %p210 = scmp.eq.s32.totalorder %s37, 0
      %p211 = por %p209, %p210
      %s213 = sadd.s32 %s212, 1
      %p216 = scmp.eq.s32.totalorder %s31, 1
      %p217 = scmp.ne.s32.totalorder %s212, %s214
      %p218 = scmp.eq.s32.totalorder %s31, 0
      %p219 = por %p217, %p218
      %p220 = scmp.ne.s32.totalorder %s212, %s214
      %p221 = scmp.eq.s32.totalorder %s36, 1
      %p222 = por %p220, %p221
      %p223 = scmp.ne.s32.totalorder %s214, %s215
      %p224 = scmp.eq.s32.totalorder %s36, 0
      %p225 = por %p223, %p224
      %p226 = scmp.ne.s32.totalorder %s214, %s215
      %p227 = scmp.eq.s32.totalorder %s37, 1
      %p228 = por %p226, %p227
      %p230 = scmp.ne.s32.totalorder %s215, %s229
      %p231 = scmp.eq.s32.totalorder %s37, 0
      %p232 = por %p230, %p231
      %s234 = sadd.s32 %s233, 1
      %p237 = scmp.eq.s32.totalorder %s31, 1
      %p238 = scmp.ne.s32.totalorder %s233, %s235
      %p239 = scmp.eq.s32.totalorder %s31, 0
      %p240 = por %p238, %p239
      %p241 = scmp.ne.s32.totalorder %s233, %s235
      %p242 = scmp.eq.s32.totalorder %s36, 1
      %p243 = por %p241, %p242
      %p244 = scmp.ne.s32.totalorder %s235, %s236
      %p245 = scmp.eq.s32.totalorder %s36, 0
      %p246 = por %p244, %p245
      %p247 = scmp.ne.s32.totalorder %s235, %s236
      %p248 = scmp.eq.s32.totalorder %s37, 1
      %p249 = por %p247, %p248
      %p251 = scmp.ne.s32.totalorder %s236, %s250
      %p252 = scmp.eq.s32.totalorder %s37, 0
      %p253 = por %p251, %p252
      %s255 = sadd.s32 %s254, 1
      %p258 = scmp.eq.s32.totalorder %s31, 1
      %p259 = scmp.ne.s32.totalorder %s254, %s256
      %p260 = scmp.eq.s32.totalorder %s31, 0
      %p261 = por %p259, %p260
      %p262 = scmp.ne.s32.totalorder %s254, %s256
      %p263 = scmp.eq.s32.totalorder %s36, 1
      %p264 = por %p262, %p263
      %p265 = scmp.ne.s32.totalorder %s256, %s257
      %p266 = scmp.eq.s32.totalorder %s36, 0
      %p267 = por %p265, %p266
      %p268 = scmp.ne.s32.totalorder %s256, %s257
      %p269 = scmp.eq.s32.totalorder %s37, 1
      %p270 = por %p268, %p269
      %p272 = scmp.ne.s32.totalorder %s257, %s271
      %p273 = scmp.eq.s32.totalorder %s37, 0
      %p274 = por %p272, %p273
      %s276 = sadd.s32 %s275, 1
      %p279 = scmp.eq.s32.totalorder %s31, 1
      %p280 = scmp.ne.s32.totalorder %s275, %s277
      %p281 = scmp.eq.s32.totalorder %s31, 0
      %p282 = por %p280, %p281
      %p283 = scmp.ne.s32.totalorder %s275, %s277
      %p284 = scmp.eq.s32.totalorder %s36, 1
      %p285 = por %p283, %p284
      %p286 = scmp.ne.s32.totalorder %s277, %s278
      %p287 = scmp.eq.s32.totalorder %s36, 0
      %p288 = por %p286, %p287
      %p289 = scmp.ne.s32.totalorder %s277, %s278
      %p290 = scmp.eq.s32.totalorder %s37, 1
      %p291 = por %p289, %p290
      %p293 = scmp.ne.s32.totalorder %s278, %s292
      %p294 = scmp.eq.s32.totalorder %s37, 0
      %p295 = por %p293, %p294
      %s297 = sadd.s32 %s296, 1
      %p300 = scmp.eq.s32.totalorder %s31, 1
      %p301 = scmp.ne.s32.totalorder %s296, %s298
      %p302 = scmp.eq.s32.totalorder %s31, 0
      %p303 = por %p301, %p302
      %p304 = scmp.ne.s32.totalorder %s296, %s298
      %p305 = scmp.eq.s32.totalorder %s36, 1
      %p306 = por %p304, %p305
      %p307 = scmp.ne.s32.totalorder %s298, %s299
      %p308 = scmp.eq.s32.totalorder %s36, 0
      %p309 = por %p307, %p308
      %p310 = scmp.ne.s32.totalorder %s298, %s299
      %p311 = scmp.eq.s32.totalorder %s37, 1
      %p312 = por %p310, %p311
      %p314 = scmp.ne.s32.totalorder %s299, %s313
      %p315 = scmp.eq.s32.totalorder %s37, 0
      %p316 = por %p314, %p315
      %s318 = sadd.s32 %s317, 1
      %p321 = scmp.eq.s32.totalorder %s31, 1
      %p322 = scmp.ne.s32.totalorder %s317, %s319
      %p323 = scmp.eq.s32.totalorder %s31, 0
      %p324 = por %p322, %p323
      %p325 = scmp.ne.s32.totalorder %s317, %s319
      %p326 = scmp.eq.s32.totalorder %s36, 1
      %p327 = por %p325, %p326
      %p328 = scmp.ne.s32.totalorder %s319, %s320
      %p329 = scmp.eq.s32.totalorder %s36, 0
      %p330 = por %p328, %p329
      %p331 = scmp.ne.s32.totalorder %s319, %s320
      %p332 = scmp.eq.s32.totalorder %s37, 1
      %p333 = por %p331, %p332
      %p335 = scmp.ne.s32.totalorder %s320, %s334
      %p336 = scmp.eq.s32.totalorder %s37, 0
      %p337 = por %p335, %p336
      %s339 = sadd.s32 %s338, 1
      %p342 = scmp.eq.s32.totalorder %s31, 1
      %p343 = scmp.ne.s32.totalorder %s338, %s340
      %p344 = scmp.eq.s32.totalorder %s31, 0
      %p345 = por %p343, %p344
      %p346 = scmp.ne.s32.totalorder %s338, %s340
      %p347 = scmp.eq.s32.totalorder %s36, 1
      %p348 = por %p346, %p347
      %p349 = scmp.ne.s32.totalorder %s340, %s341
      %p350 = scmp.eq.s32.totalorder %s36, 0
      %p351 = por %p349, %p350
      %p352 = scmp.ne.s32.totalorder %s340, %s341
      %p353 = scmp.eq.s32.totalorder %s37, 1
      %p354 = por %p352, %p353
      %p356 = scmp.ne.s32.totalorder %s341, %s355
      %p357 = scmp.eq.s32.totalorder %s37, 0
      %p358 = por %p356, %p357
      %s359 = ssub.s32 %s31, %s38
      %p360 = scmp.eq.s32.totalorder %s359, 0
      %s362 = sadd.s32 %s361, 1
      %s363 = scalar_select %p360, %s361, %s362
      %p366 = pneg %p360
      %p367 = scmp.eq.s32.totalorder %s31, 1
      %p368 = por %p366, %p367
      %p369 = scmp.ne.s32.totalorder %s361, %s364
      %p370 = scmp.eq.s32.totalorder %s31, 0
      %p371 = por %p369, %p370
      %p372 = scmp.ne.s32.totalorder %s361, %s364
      %p373 = scmp.eq.s32.totalorder %s36, 1
      %p374 = por %p372, %p373
      %p375 = scmp.ne.s32.totalorder %s364, %s365
      %p376 = scmp.eq.s32.totalorder %s36, 0
      %p377 = por %p375, %p376
      %p378 = scmp.ne.s32.totalorder %s364, %s365
      %p379 = scmp.eq.s32.totalorder %s37, 1
      %p380 = por %p378, %p379
      %p382 = scmp.ne.s32.totalorder %s365, %s381
      %p383 = scmp.eq.s32.totalorder %s37, 0
      %p384 = por %p382, %p383
      %p385 = scmp.le.s32.totalorder 1, %s31
      %p386 = scmp.lt.s32.totalorder %s31, 3
      %p387 = pnand %p385, %p386
      %p388 = pneg %p387
      // Predicated region
      $region9: #{tpu_custom_call.1} parent=5 // pred_check
        _
      $region10: #{tpu_custom_call.1} parent=5 // pred_check_branch
        %390 = sbr.rel (%p387) target = $region12
      $region11: #{tpu_custom_call.1} parent=5 // pred_region
        %s391 = ssub.s32 %s31, 1
        // Predicated region
        $region13: #{tpu_custom_call.1} parent=11 // pred_check
          %p392 = pneg %p78
        $region14: #{tpu_custom_call.1} parent=11 // pred_check_branch
          %394 = sbr.rel (%p392) target = $region16
        $region15: #{tpu_custom_call.1} parent=11 // pred_region
          %s396 = ssub.s32 128, 128
          %397 = vsyncadd [#allocation7], %s396
          %s399 = sshll.u32 [#allocation6], 4
          %s400 = int_to_ptr.vmem [resolvable:$true] %s399
          %402 = dma.hbm_to_vmem [thread:$0]  %s1, 128, %s400, [#allocation7]
        $region16: #{tpu_custom_call.1} parent=11 // pred_fallthru
          _
        // Predicated region
        $region17: #{tpu_custom_call.1} parent=11 // pred_check
          %p403 = pneg %p99
        $region18: #{tpu_custom_call.1} parent=11 // pred_check_branch
          %405 = sbr.rel (%p403) target = $region20
        $region19: #{tpu_custom_call.1} parent=11 // pred_region
          %s407 = ssub.s32 1024, 1024
          %408 = vsyncadd [#allocation7], %s407
          %s409 = sshll.u32 [#allocation8], 4
          %s410 = int_to_ptr.vmem [resolvable:$true] %s409
          %415 = dma.hbm_to_vmem [thread:$0]  %s2, 1024, %s410, [#allocation7], 64, 64, 4
        $region20: #{tpu_custom_call.1} parent=11 // pred_fallthru
          _
        // Predicated region
        $region21: #{tpu_custom_call.1} parent=11 // pred_check
          %p416 = pneg %p120
        $region22: #{tpu_custom_call.1} parent=11 // pred_check_branch
          %418 = sbr.rel (%p416) target = $region24
        $region23: #{tpu_custom_call.1} parent=11 // pred_region
          %s420 = ssub.s32 1024, 1024
          %421 = vsyncadd [#allocation10], %s420
          %s422 = sshll.u32 [#allocation9], 4
          %s423 = int_to_ptr.vmem [resolvable:$true] %s422
          %428 = dma.hbm_to_vmem [thread:$0]  %s3, 1024, %s423, [#allocation10], 64, 64, 4
        $region24: #{tpu_custom_call.1} parent=11 // pred_fallthru
          _
        // Predicated region
        $region25: #{tpu_custom_call.1} parent=11 // pred_check
          %p429 = pneg %p141
        $region26: #{tpu_custom_call.1} parent=11 // pred_check_branch
          %431 = sbr.rel (%p429) target = $region28
        $region27: #{tpu_custom_call.1} parent=11 // pred_region
          %s433 = ssub.s32 1024, 1024
          %434 = vsyncadd [#allocation10], %s433
          %s435 = sshll.u32 [#allocation11], 4
          %s436 = int_to_ptr.vmem [resolvable:$true] %s435
          %441 = dma.hbm_to_vmem [thread:$0]  %s4, 1024, %s436, [#allocation10], 64, 64, 4
        $region28: #{tpu_custom_call.1} parent=11 // pred_fallthru
          _
        // Predicated region
        $region29: #{tpu_custom_call.1} parent=11 // pred_check
          %p442 = pneg %p162
        $region30: #{tpu_custom_call.1} parent=11 // pred_check_branch
          %444 = sbr.rel (%p442) target = $region32
        $region31: #{tpu_custom_call.1} parent=11 // pred_region
          %s446 = ssub.s32 1024, 1024
          %447 = vsyncadd [#allocation13], %s446
          %s448 = sshll.u32 [#allocation12], 4
          %s449 = int_to_ptr.vmem [resolvable:$true] %s448
          %454 = dma.hbm_to_vmem [thread:$0]  %s5, 1024, %s449, [#allocation13], 64, 64, 4
        $region32: #{tpu_custom_call.1} parent=11 // pred_fallthru
          _
        // Predicated region
        $region33: #{tpu_custom_call.1} parent=11 // pred_check
          %p455 = pneg %p183
        $region34: #{tpu_custom_call.1} parent=11 // pred_check_branch
          %457 = sbr.rel (%p455) target = $region36
        $region35: #{tpu_custom_call.1} parent=11 // pred_region
          _
        $region36: #{tpu_custom_call.1} parent=11 // pred_fallthru
          _
        // Predicated region
        $region37: #{tpu_custom_call.1} parent=11 // pred_check
          %p458 = pneg %p204
        $region38: #{tpu_custom_call.1} parent=11 // pred_check_branch
          %460 = sbr.rel (%p458) target = $region40
        $region39: #{tpu_custom_call.1} parent=11 // pred_region
          _
        $region40: #{tpu_custom_call.1} parent=11 // pred_fallthru
          _
        // Predicated region
        $region41: #{tpu_custom_call.1} parent=11 // pred_check
          %p461 = pneg %p225
        $region42: #{tpu_custom_call.1} parent=11 // pred_check_branch
          %463 = sbr.rel (%p461) target = $region44
        $region43: #{tpu_custom_call.1} parent=11 // pred_region
          _
        $region44: #{tpu_custom_call.1} parent=11 // pred_fallthru
          _
        // Predicated region
        $region45: #{tpu_custom_call.1} parent=11 // pred_check
          %p464 = pneg %p246
        $region46: #{tpu_custom_call.1} parent=11 // pred_check_branch
          %466 = sbr.rel (%p464) target = $region48
        $region47: #{tpu_custom_call.1} parent=11 // pred_region
          %s468 = ssub.s32 4096, 4096
          %469 = vsyncadd [#allocation13], %s468
          %s470 = sshll.u32 [#allocation14], 4
          %s471 = int_to_ptr.vmem [resolvable:$true] %s470
          %476 = dma.hbm_to_vmem [thread:$0]  %s9, 4096, %s471, [#allocation13], 256, 256, 16
        $region48: #{tpu_custom_call.1} parent=11 // pred_fallthru
          _
        // Predicated region
        $region49: #{tpu_custom_call.1} parent=11 // pred_check
          %p477 = pneg %p267
        $region50: #{tpu_custom_call.1} parent=11 // pred_check_branch
          %479 = sbr.rel (%p477) target = $region52
        $region51: #{tpu_custom_call.1} parent=11 // pred_region
          _
        $region52: #{tpu_custom_call.1} parent=11 // pred_fallthru
          _
        // Predicated region
        $region53: #{tpu_custom_call.1} parent=11 // pred_check
          %p480 = pneg %p288
        $region54: #{tpu_custom_call.1} parent=11 // pred_check_branch
          %482 = sbr.rel (%p480) target = $region56
        $region55: #{tpu_custom_call.1} parent=11 // pred_region
          %s484 = ssub.s32 4096, 4096
          %485 = vsyncadd [#allocation16], %s484
          %s486 = sshll.u32 [#allocation15], 4
          %s487 = int_to_ptr.vmem [resolvable:$true] %s486
          %492 = dma.hbm_to_vmem [thread:$0]  %s11, 4096, %s487, [#allocation16], 64, 64, 4
        $region56: #{tpu_custom_call.1} parent=11 // pred_fallthru
          _
        // Predicated region
        $region57: #{tpu_custom_call.1} parent=11 // pred_check
          %p493 = pneg %p309
        $region58: #{tpu_custom_call.1} parent=11 // pred_check_branch
          %495 = sbr.rel (%p493) target = $region60
        $region59: #{tpu_custom_call.1} parent=11 // pred_region
          _
        $region60: #{tpu_custom_call.1} parent=11 // pred_fallthru
          _
        // Predicated region
        $region61: #{tpu_custom_call.1} parent=11 // pred_check
          %p496 = pneg %p330
        $region62: #{tpu_custom_call.1} parent=11 // pred_check_branch
          %498 = sbr.rel (%p496) target = $region64
        $region63: #{tpu_custom_call.1} parent=11 // pred_region
          _
        $region64: #{tpu_custom_call.1} parent=11 // pred_fallthru
          _
        // Predicated region
        $region65: #{tpu_custom_call.1} parent=11 // pred_check
          %p499 = pneg %p351
        $region66: #{tpu_custom_call.1} parent=11 // pred_check_branch
          %501 = sbr.rel (%p499) target = $region68
        $region67: #{tpu_custom_call.1} parent=11 // pred_region
          _
        $region68: #{tpu_custom_call.1} parent=11 // pred_fallthru
          _
      $region12: #{tpu_custom_call.1} parent=5 // pred_fallthru
        _
      %p502 = scmp.lt.s32.totalorder %s31, 2
      // Predicated region
      $region69: #{tpu_custom_call.1} parent=5 // pred_check
        %p503 = pneg %p502
      $region70: #{tpu_custom_call.1} parent=5 // pred_check_branch
        %505 = sbr.rel (%p503) target = $region72
      $region71: #{tpu_custom_call.1} parent=5 // pred_region
        // Predicated region
        $region73: #{tpu_custom_call.1} parent=71 // pred_check
          %p506 = pneg %p51
        $region74: #{tpu_custom_call.1} parent=71 // pred_check_branch
          %508 = sbr.rel (%p506) target = $region76
        $region75: #{tpu_custom_call.1} parent=71 // pred_region
          %s509 = sand.u32 %s41, 1
          %s510 = scalar_lea.sflag [#allocation4], %s509
          %s511 = sand.u32 %s41, 1
          %s512 = smul.addr %s511, 8
          %s513 = scalar_lea.vmem [#allocation3], %s512
          %s515 = ssub.s32 128, 128
          %516 = vsyncadd %s510, %s515
          %s517 = smul.addr %s31, 128
          %s518 = scalar_lea.hbm %s0, %s517
          %s520 = sshll.u32 %s513, 4
          %s521 = int_to_ptr.vmem [resolvable:$true] %s520
          %523 = dma.hbm_to_vmem [thread:$0]  %s518, 128, %s521, %s510
        $region76: #{tpu_custom_call.1} parent=71 // pred_fallthru
          _
      $region72: #{tpu_custom_call.1} parent=5 // pred_fallthru
        _
      %p524 = scmp.le.s32.totalorder 1, %s31
      %p525 = scmp.lt.s32.totalorder %s31, 3
      %p526 = pnand %p524, %p525
      %p527 = pneg %p526
      // Predicated region
      $region77: #{tpu_custom_call.1} parent=5 // pred_check
        _
      $region78: #{tpu_custom_call.1} parent=5 // pred_check_branch
        %529 = sbr.rel (%p526) target = $region80
      $region79: #{tpu_custom_call.1} parent=5 // pred_region
        %s530 = ssub.s32 %s31, 1
        %s531 = sand.u32 %s44, 1
        %s532 = scalar_lea.sflag [#allocation4], %s531
        %s533 = sand.u32 %s44, 1
        %s534 = smul.addr %s533, 8
        %s535 = scalar_lea.vmem [#allocation3], %s534
        // Predicated region
        $region81: #{tpu_custom_call.1} parent=79 // pred_check
          %p536 = pneg %p57
        $region82: #{tpu_custom_call.1} parent=79 // pred_check_branch
          %538 = sbr.rel (%p536) target = $region84
        $region83: #{tpu_custom_call.1} parent=79 // pred_region
          %539 = dma.done %s532, 128
        $region84: #{tpu_custom_call.1} parent=79 // pred_fallthru
          _
        // Predicated region
        $region85: #{tpu_custom_call.1} parent=79 // pred_check
          %p540 = pneg %p78
        $region86: #{tpu_custom_call.1} parent=79 // pred_check_branch
          %542 = sbr.rel (%p540) target = $region88
        $region87: #{tpu_custom_call.1} parent=79 // pred_region
          %543 = dma.done [#allocation7], 128
        $region88: #{tpu_custom_call.1} parent=79 // pred_fallthru
          _
        // Predicated region
        $region89: #{tpu_custom_call.1} parent=79 // pred_check
          %p544 = pneg %p99
        $region90: #{tpu_custom_call.1} parent=79 // pred_check_branch
          %546 = sbr.rel (%p544) target = $region92
        $region91: #{tpu_custom_call.1} parent=79 // pred_region
          %547 = dma.done [#allocation7], 1024
        $region92: #{tpu_custom_call.1} parent=79 // pred_fallthru
          _
        // Predicated region
        $region93: #{tpu_custom_call.1} parent=79 // pred_check
          %p548 = pneg %p120
        $region94: #{tpu_custom_call.1} parent=79 // pred_check_branch
          %550 = sbr.rel (%p548) target = $region96
        $region95: #{tpu_custom_call.1} parent=79 // pred_region
          %551 = dma.done [#allocation10], 1024
        $region96: #{tpu_custom_call.1} parent=79 // pred_fallthru
          _
        // Predicated region
        $region97: #{tpu_custom_call.1} parent=79 // pred_check
          %p552 = pneg %p141
        $region98: #{tpu_custom_call.1} parent=79 // pred_check_branch
          %554 = sbr.rel (%p552) target = $region100
        $region99: #{tpu_custom_call.1} parent=79 // pred_region
          %555 = dma.done [#allocation10], 1024
        $region100: #{tpu_custom_call.1} parent=79 // pred_fallthru
          _
        // Predicated region
        $region101: #{tpu_custom_call.1} parent=79 // pred_check
          %p556 = pneg %p162
        $region102: #{tpu_custom_call.1} parent=79 // pred_check_branch
          %558 = sbr.rel (%p556) target = $region104
        $region103: #{tpu_custom_call.1} parent=79 // pred_region
          %559 = dma.done [#allocation13], 1024
        $region104: #{tpu_custom_call.1} parent=79 // pred_fallthru
          _
        // Predicated region
        $region105: #{tpu_custom_call.1} parent=79 // pred_check
          %p560 = pneg %p246
        $region106: #{tpu_custom_call.1} parent=79 // pred_check_branch
          %562 = sbr.rel (%p560) target = $region108
        $region107: #{tpu_custom_call.1} parent=79 // pred_region
          %563 = dma.done [#allocation13], 4096
        $region108: #{tpu_custom_call.1} parent=79 // pred_fallthru
          _
        // Predicated region
        $region109: #{tpu_custom_call.1} parent=79 // pred_check
          %p564 = pneg %p288
        $region110: #{tpu_custom_call.1} parent=79 // pred_check_branch
          %566 = sbr.rel (%p564) target = $region112
        $region111: #{tpu_custom_call.1} parent=79 // pred_region
          %567 = dma.done [#allocation16], 4096
        $region112: #{tpu_custom_call.1} parent=79 // pred_fallthru
          _
        %s568 = sand.u32 %s44, 1
        %s569 = scalar_lea.sflag [#allocation4], %s568
        %s570 = sand.u32 %s44, 1
        %s571 = smul.addr %s570, 8
        %s572 = scalar_lea.vmem [#allocation3], %s571
        %p573 = pneg %p57
        %p574 = pneg %p54
        %p575 = pneg %p78
        %p576 = pneg %p75
        %p577 = pneg %p99
        %p578 = pneg %p96
        %p579 = pneg %p120
        %p580 = pneg %p117
        %p581 = pneg %p141
        %p582 = pneg %p138
        %p583 = pneg %p162
        %p584 = pneg %p159
        %p585 = pneg %p183
        %p586 = pneg %p180
        %p587 = pneg %p204
        %p588 = pneg %p201
        %p589 = pneg %p225
        %p590 = pneg %p222
        %p591 = pneg %p246
        %p592 = pneg %p243
        %p593 = pneg %p267
        %p594 = pneg %p264
        %p595 = pneg %p288
        %p596 = pneg %p285
        %p597 = pneg %p309
        %p598 = pneg %p306
        %p599 = pneg %p330
        %p600 = pneg %p327
        %p601 = pneg %p351
        %p602 = pneg %p348
        %p603 = pneg %p377
        %p604 = pneg %p374
        %s605 = sand.u32 %s364, 1
        %s606 = scalar_lea.sflag [#allocation5], %s605
        %s607 = sand.u32 %s364, 1
        %s608 = smul.addr %s607, 8
        %s609 = scalar_lea.vmem [#allocation17], %s608
        %v611 = vld [vmem:[%s535] sm:$0xff]
        %v612 = vpack.c.bf16 %v611, %v611
        %v613 = vld [vmem:[#allocation8] sm:$0xf]
        %v614 = vld [vmem:[#allocation8 + $0x4] sm:$0xf]
        %v615 = vld [vmem:[#allocation8 + $0x8] sm:$0xf]
        %v616 = vld [vmem:[#allocation8 + $0xc] sm:$0xf]
        %v617 = vld [vmem:[#allocation8 + $0x10] sm:$0xf]
        %v618 = vld [vmem:[#allocation8 + $0x14] sm:$0xf]
        %v619 = vld [vmem:[#allocation8 + $0x18] sm:$0xf]
        %v620 = vld [vmem:[#allocation8 + $0x1c] sm:$0xf]
        %v621 = vld [vmem:[#allocation8 + $0x20] sm:$0xf]
        %v622 = vld [vmem:[#allocation8 + $0x24] sm:$0xf]
        %v623 = vld [vmem:[#allocation8 + $0x28] sm:$0xf]
        %v624 = vld [vmem:[#allocation8 + $0x2c] sm:$0xf]
        %v625 = vld [vmem:[#allocation8 + $0x30] sm:$0xf]
        %v626 = vld [vmem:[#allocation8 + $0x34] sm:$0xf]
        %v627 = vld [vmem:[#allocation8 + $0x38] sm:$0xf]
        %v628 = vld [vmem:[#allocation8 + $0x3c] sm:$0xf]
        %v645 = vunpack.c.l.b16 %v613
        %v646 = vunpack.c.l.b16 %v614
        %v647 = vunpack.c.l.b16 %v615
        %v648 = vunpack.c.l.b16 %v616
        %v649 = vunpack.c.l.b16 %v617
        %v650 = vunpack.c.l.b16 %v618
        %v651 = vunpack.c.l.b16 %v619
        %v652 = vunpack.c.l.b16 %v620
        %v653 = vunpack.c.l.b16 %v621
        %v654 = vunpack.c.l.b16 %v622
        %v655 = vunpack.c.l.b16 %v623
        %v656 = vunpack.c.l.b16 %v624
        %v657 = vunpack.c.l.b16 %v625
        %v658 = vunpack.c.l.b16 %v626
        %v659 = vunpack.c.l.b16 %v627
        %v660 = vunpack.c.l.b16 %v628
        %v661 = vpack.c.b16 %v646, %v645
        %v662 = vpack.c.b16 %v648, %v647
        %v663 = vpack.c.b16 %v650, %v649
        %v664 = vpack.c.b16 %v652, %v651
        %v665 = vpack.c.b16 %v654, %v653
        %v666 = vpack.c.b16 %v656, %v655
        %v667 = vpack.c.b16 %v658, %v657
        %v668 = vpack.c.b16 %v660, %v659
        %677 = vmatprep.subr.bf16.mxu0 0
        %678 = vmatpush1.bf16.msra.mxu0 %v668
        %679 = vmatprep.subr.bf16.mxu0 0
        %680 = vmatpush1.bf16.msra.mxu0 %v667
        %681 = vmatprep.subr.bf16.mxu0 0
        %682 = vmatpush1.bf16.msra.mxu0 %v666
        %683 = vmatprep.subr.bf16.mxu0 0
        %684 = vmatpush1.bf16.msra.mxu0 %v665
        %685 = vmatprep.subr.bf16.mxu0 0
        %686 = vmatpush1.bf16.msra.mxu0 %v664
        %687 = vmatprep.subr.bf16.mxu0 0
        %688 = vmatpush1.bf16.msra.mxu0 %v663
        %689 = vmatprep.subr.bf16.mxu0 0
        %690 = vmatpush1.bf16.msra.mxu0 %v662
        %691 = vmatprep.subr.bf16.mxu0 0
        %692 = vmatpush1.bf16.msra.mxu0 %v661
        %693 = vmatprep.subr.bf16.mxu0 0
        %694 = vmatpush2.bf16.msra.mxu0 0
        %695 = vmatprep.subr.bf16.mxu0 0
        %696 = vmatpush2.bf16.msra.mxu0 0
        %697 = vmatprep.subr.bf16.mxu0 0
        %698 = vmatpush2.bf16.msra.mxu0 0
        %699 = vmatprep.subr.bf16.mxu0 0
        %700 = vmatpush2.bf16.msra.mxu0 0
        %701 = vmatprep.subr.bf16.mxu0 0
        %702 = vmatpush2.bf16.msra.mxu0 0
        %703 = vmatprep.subr.bf16.mxu0 0
        %704 = vmatpush2.bf16.msra.mxu0 0
        %705 = vmatprep.subr.bf16.mxu0 0
        %706 = vmatpush2.bf16.msra.mxu0 0
        %707 = vmatprep.subr.bf16.mxu0 0
        %708 = vmatpush2.bf16.msra.mxu0 0
        %709 = vmatprep.mubr.bf16.mxu0 0
        %710 = vmatmul.mubr.bf16.gmra.mxu0 %v612
        %v711 = vpop.f32.mrf.mxu0
        %v712 = vadd.f32 0.0, %v711
        %v713 = vpop.f32.mrf.mxu0
        %v714 = vpop.f32.mrf.mxu0
        %v715 = vpop.f32.mrf.mxu0
        %716 = vdwg.mxu0
        %v717 = vld [vmem:[#allocation9] sm:$0xf]
        %v718 = vld [vmem:[#allocation9 + $0x4] sm:$0xf]
        %v719 = vld [vmem:[#allocation9 + $0x8] sm:$0xf]
        %v720 = vld [vmem:[#allocation9 + $0xc] sm:$0xf]
        %v721 = vld [vmem:[#allocation9 + $0x10] sm:$0xf]
        %v722 = vld [vmem:[#allocation9 + $0x14] sm:$0xf]
        %v723 = vld [vmem:[#allocation9 + $0x18] sm:$0xf]
        %v724 = vld [vmem:[#allocation9 + $0x1c] sm:$0xf]
        %v725 = vld [vmem:[#allocation9 + $0x20] sm:$0xf]
        %v726 = vld [vmem:[#allocation9 + $0x24] sm:$0xf]
        %v727 = vld [vmem:[#allocation9 + $0x28] sm:$0xf]
        %v728 = vld [vmem:[#allocation9 + $0x2c] sm:$0xf]
        %v729 = vld [vmem:[#allocation9 + $0x30] sm:$0xf]
        %v730 = vld [vmem:[#allocation9 + $0x34] sm:$0xf]
        %v731 = vld [vmem:[#allocation9 + $0x38] sm:$0xf]
        %v732 = vld [vmem:[#allocation9 + $0x3c] sm:$0xf]
        %v749 = vunpack.c.l.b16 %v717
        %v750 = vunpack.c.l.b16 %v718
        %v751 = vunpack.c.l.b16 %v719
        %v752 = vunpack.c.l.b16 %v720
        %v753 = vunpack.c.l.b16 %v721
        %v754 = vunpack.c.l.b16 %v722
        %v755 = vunpack.c.l.b16 %v723
        %v756 = vunpack.c.l.b16 %v724
        %v757 = vunpack.c.l.b16 %v725
        %v758 = vunpack.c.l.b16 %v726
        %v759 = vunpack.c.l.b16 %v727
        %v760 = vunpack.c.l.b16 %v728
        %v761 = vunpack.c.l.b16 %v729
        %v762 = vunpack.c.l.b16 %v730
        %v763 = vunpack.c.l.b16 %v731
        %v764 = vunpack.c.l.b16 %v732
        %v765 = vpack.c.b16 %v750, %v749
        %v766 = vpack.c.b16 %v752, %v751
        %v767 = vpack.c.b16 %v754, %v753
        %v768 = vpack.c.b16 %v756, %v755
        %v769 = vpack.c.b16 %v758, %v757
        %v770 = vpack.c.b16 %v760, %v759
        %v771 = vpack.c.b16 %v762, %v761
        %v772 = vpack.c.b16 %v764, %v763
        %781 = vmatprep.subr.bf16.mxu0 0
        %782 = vmatpush1.bf16.msra.mxu0 %v772
        %783 = vmatprep.subr.bf16.mxu0 0
        %784 = vmatpush1.bf16.msra.mxu0 %v771
        %785 = vmatprep.subr.bf16.mxu0 0
        %786 = vmatpush1.bf16.msra.mxu0 %v770
        %787 = vmatprep.subr.bf16.mxu0 0
        %788 = vmatpush1.bf16.msra.mxu0 %v769
        %789 = vmatprep.subr.bf16.mxu0 0
        %790 = vmatpush1.bf16.msra.mxu0 %v768
        %791 = vmatprep.subr.bf16.mxu0 0
        %792 = vmatpush1.bf16.msra.mxu0 %v767
        %793 = vmatprep.subr.bf16.mxu0 0
        %794 = vmatpush1.bf16.msra.mxu0 %v766
        %795 = vmatprep.subr.bf16.mxu0 0
        %796 = vmatpush1.bf16.msra.mxu0 %v765
        %797 = vmatprep.subr.bf16.mxu0 0
        %798 = vmatpush2.bf16.msra.mxu0 0
        %799 = vmatprep.subr.bf16.mxu0 0
        %800 = vmatpush2.bf16.msra.mxu0 0
        %801 = vmatprep.subr.bf16.mxu0 0
        %802 = vmatpush2.bf16.msra.mxu0 0
        %803 = vmatprep.subr.bf16.mxu0 0
        %804 = vmatpush2.bf16.msra.mxu0 0
        %805 = vmatprep.subr.bf16.mxu0 0
        %806 = vmatpush2.bf16.msra.mxu0 0
        %807 = vmatprep.subr.bf16.mxu0 0
        %808 = vmatpush2.bf16.msra.mxu0 0
        %809 = vmatprep.subr.bf16.mxu0 0
        %810 = vmatpush2.bf16.msra.mxu0 0
        %811 = vmatprep.subr.bf16.mxu0 0
        %812 = vmatpush2.bf16.msra.mxu0 0
        %813 = vmatprep.mubr.bf16.mxu0 0
        %814 = vmatmul.mubr.bf16.gmra.mxu0 %v612
        %v815 = vpop.f32.mrf.mxu0
        %v816 = vadd.f32 0.0, %v815
        %v817 = vpop.f32.mrf.mxu0
        %v818 = vpop.f32.mrf.mxu0
        %v819 = vpop.f32.mrf.mxu0
        %820 = vdwg.mxu0
        %v821 = vld [vmem:[#allocation11] sm:$0xf]
        %v822 = vld [vmem:[#allocation11 + $0x4] sm:$0xf]
        %v823 = vld [vmem:[#allocation11 + $0x8] sm:$0xf]
        %v824 = vld [vmem:[#allocation11 + $0xc] sm:$0xf]
        %v825 = vld [vmem:[#allocation11 + $0x10] sm:$0xf]
        %v826 = vld [vmem:[#allocation11 + $0x14] sm:$0xf]
        %v827 = vld [vmem:[#allocation11 + $0x18] sm:$0xf]
        %v828 = vld [vmem:[#allocation11 + $0x1c] sm:$0xf]
        %v829 = vld [vmem:[#allocation11 + $0x20] sm:$0xf]
        %v830 = vld [vmem:[#allocation11 + $0x24] sm:$0xf]
        %v831 = vld [vmem:[#allocation11 + $0x28] sm:$0xf]
        %v832 = vld [vmem:[#allocation11 + $0x2c] sm:$0xf]
        %v833 = vld [vmem:[#allocation11 + $0x30] sm:$0xf]
        %v834 = vld [vmem:[#allocation11 + $0x34] sm:$0xf]
        %v835 = vld [vmem:[#allocation11 + $0x38] sm:$0xf]
        %v836 = vld [vmem:[#allocation11 + $0x3c] sm:$0xf]
        %v853 = vunpack.c.l.b16 %v821
        %v854 = vunpack.c.l.b16 %v822
        %v855 = vunpack.c.l.b16 %v823
        %v856 = vunpack.c.l.b16 %v824
        %v857 = vunpack.c.l.b16 %v825
        %v858 = vunpack.c.l.b16 %v826
        %v859 = vunpack.c.l.b16 %v827
        %v860 = vunpack.c.l.b16 %v828
        %v861 = vunpack.c.l.b16 %v829
        %v862 = vunpack.c.l.b16 %v830
        %v863 = vunpack.c.l.b16 %v831
        %v864 = vunpack.c.l.b16 %v832
        %v865 = vunpack.c.l.b16 %v833
        %v866 = vunpack.c.l.b16 %v834
        %v867 = vunpack.c.l.b16 %v835
        %v868 = vunpack.c.l.b16 %v836
        %v869 = vpack.c.b16 %v854, %v853
        %v870 = vpack.c.b16 %v856, %v855
        %v871 = vpack.c.b16 %v858, %v857
        %v872 = vpack.c.b16 %v860, %v859
        %v873 = vpack.c.b16 %v862, %v861
        %v874 = vpack.c.b16 %v864, %v863
        %v875 = vpack.c.b16 %v866, %v865
        %v876 = vpack.c.b16 %v868, %v867
        %885 = vmatprep.subr.bf16.mxu0 0
        %886 = vmatpush1.bf16.msra.mxu0 %v876
        %887 = vmatprep.subr.bf16.mxu0 0
        %888 = vmatpush1.bf16.msra.mxu0 %v875
        %889 = vmatprep.subr.bf16.mxu0 0
        %890 = vmatpush1.bf16.msra.mxu0 %v874
        %891 = vmatprep.subr.bf16.mxu0 0
        %892 = vmatpush1.bf16.msra.mxu0 %v873
        %893 = vmatprep.subr.bf16.mxu0 0
        %894 = vmatpush1.bf16.msra.mxu0 %v872
        %895 = vmatprep.subr.bf16.mxu0 0
        %896 = vmatpush1.bf16.msra.mxu0 %v871
        %897 = vmatprep.subr.bf16.mxu0 0
        %898 = vmatpush1.bf16.msra.mxu0 %v870
        %899 = vmatprep.subr.bf16.mxu0 0
        %900 = vmatpush1.bf16.msra.mxu0 %v869
        %901 = vmatprep.subr.bf16.mxu0 0
        %902 = vmatpush2.bf16.msra.mxu0 0
        %903 = vmatprep.subr.bf16.mxu0 0
        %904 = vmatpush2.bf16.msra.mxu0 0
        %905 = vmatprep.subr.bf16.mxu0 0
        %906 = vmatpush2.bf16.msra.mxu0 0
        %907 = vmatprep.subr.bf16.mxu0 0
        %908 = vmatpush2.bf16.msra.mxu0 0
        %909 = vmatprep.subr.bf16.mxu0 0
        %910 = vmatpush2.bf16.msra.mxu0 0
        %911 = vmatprep.subr.bf16.mxu0 0
        %912 = vmatpush2.bf16.msra.mxu0 0
        %913 = vmatprep.subr.bf16.mxu0 0
        %914 = vmatpush2.bf16.msra.mxu0 0
        %915 = vmatprep.subr.bf16.mxu0 0
        %916 = vmatpush2.bf16.msra.mxu0 0
        %917 = vmatprep.mubr.bf16.mxu0 0
        %918 = vmatmul.mubr.bf16.gmra.mxu0 %v612
        %v919 = vpop.f32.mrf.mxu0
        %v920 = vadd.f32 0.0, %v919
        %v921 = vpop.f32.mrf.mxu0
        %v922 = vpop.f32.mrf.mxu0
        %v923 = vpop.f32.mrf.mxu0
        %924 = vdwg.mxu0
        %v925 = vpack.c.bf16 %v712, %v712
        %v926 = vpack.c.bf16 %v816, %v816
        %v927 = vpack.c.bf16 %v920, %v920
        %v928 = vld [vmem:[#allocation6] sm:$0xff]
        %vm929 = vcmask 261120
        %v931 = vsel %vm929, %v925, 0
        %v934 = vsel %vm929, %v926, 0
        %936 = vmatprep.subr.bf16.mxu0 0
        %937 = vmatpush1.bf16.xpose.msra.mxu0 0
        %938 = vmatprep.subr.bf16.mxu0 0
        %939 = vmatpush1.bf16.xpose.msra.mxu0 0
        %940 = vmatprep.subr.bf16.mxu0 0
        %941 = vmatpush1.bf16.xpose.msra.mxu0 0
        %942 = vmatprep.subr.bf16.mxu0 0
        %943 = vmatpush1.bf16.xpose.msra.mxu0 0
        %944 = vmatprep.subr.bf16.mxu0 0
        %945 = vmatpush1.bf16.xpose.msra.mxu0 0
        %946 = vmatprep.subr.bf16.mxu0 0
        %947 = vmatpush1.bf16.xpose.msra.mxu0 0
        %948 = vmatprep.subr.bf16.mxu0 0
        %949 = vmatpush1.bf16.xpose.msra.mxu0 0
        %950 = vmatprep.subr.bf16.mxu0 0
        %951 = vmatpush1.bf16.xpose.msra.mxu0 %v934
        %952 = vmatprep.subr.bf16.mxu0 0
        %953 = vmatpush2.bf16.xpose.msra.mxu0 0
        %954 = vmatprep.subr.bf16.mxu0 0
        %955 = vmatpush2.bf16.xpose.msra.mxu0 0
        %956 = vmatprep.subr.bf16.mxu0 0
        %957 = vmatpush2.bf16.xpose.msra.mxu0 0
        %958 = vmatprep.subr.bf16.mxu0 0
        %959 = vmatpush2.bf16.xpose.msra.mxu0 0
        %960 = vmatprep.subr.bf16.mxu0 0
        %961 = vmatpush2.bf16.xpose.msra.mxu0 0
        %962 = vmatprep.subr.bf16.mxu0 0
        %963 = vmatpush2.bf16.xpose.msra.mxu0 0
        %964 = vmatprep.subr.bf16.mxu0 0
        %965 = vmatpush2.bf16.xpose.msra.mxu0 0
        %966 = vmatprep.subr.bf16.mxu0 0
        %967 = vmatpush2.bf16.xpose.msra.mxu0 0
        %968 = vmatprep.mubr.bf16.mxu0 0
        %969 = vmatmul.mubr.bf16.gmra.mxu0 %v931
        %v970 = vpop.f32.mrf.mxu0
        %v971 = vadd.f32 %v928, %v970
        %v972 = vpop.f32.mrf.mxu0
        %v973 = vpop.f32.mrf.mxu0
        %v974 = vpop.f32.mrf.mxu0
        %975 = vdwg.mxu0
        %vm976 = vcmask 64512
        %v977 = vsel %vm976, %v971, -inf
        %978 = vmax.xlane.f32.xlu0 %v977
        %v979 = vpop.xlane.xlu0 %978
        %v980 = vsub.f32 %v971, %v979
        %v981 = vmul.f32 %v980, 1.442695
        %v982 = vpow.pop %v981
        %v983 = vsel %vm976, %v982, 0.0
        %984 = vadd.xlane.f32.xlu0 %v983
        %v985 = vpop.xlane.xlu0 %984
        %v986 = vrcp.pop %v985
        %v987 = vmul.f32 %v982, %v986
        %v988 = vpack.c.bf16 %v987, %v987
        %v990 = vsel %vm976, %v988, 0
        %vm992 = vcmask 1043456
        %v994 = vsel %vm992, %v927, 0
        %996 = vmatprep.subr.bf16.mxu0 0
        %997 = vmatpush1.bf16.msra.mxu0 0
        %998 = vmatprep.subr.bf16.mxu0 0
        %999 = vmatpush1.bf16.msra.mxu0 0
        %1000 = vmatprep.subr.bf16.mxu0 0
        %1001 = vmatpush1.bf16.msra.mxu0 0
        %1002 = vmatprep.subr.bf16.mxu0 0
        %1003 = vmatpush1.bf16.msra.mxu0 0
        %1004 = vmatprep.subr.bf16.mxu0 0
        %1005 = vmatpush1.bf16.msra.mxu0 0
        %1006 = vmatprep.subr.bf16.mxu0 0
        %1007 = vmatpush1.bf16.msra.mxu0 0
        %1008 = vmatprep.subr.bf16.mxu0 0
        %1009 = vmatpush1.bf16.msra.mxu0 0
        %1010 = vmatprep.subr.bf16.mxu0 0
        %1011 = vmatpush1.bf16.msra.mxu0 %v994
        %1012 = vmatprep.subr.bf16.mxu0 0
        %1013 = vmatpush2.bf16.msra.mxu0 0
        %1014 = vmatprep.subr.bf16.mxu0 0
        %1015 = vmatpush2.bf16.msra.mxu0 0
        %1016 = vmatprep.subr.bf16.mxu0 0
        %1017 = vmatpush2.bf16.msra.mxu0 0
        %1018 = vmatprep.subr.bf16.mxu0 0
        %1019 = vmatpush2.bf16.msra.mxu0 0
        %1020 = vmatprep.subr.bf16.mxu0 0
        %1021 = vmatpush2.bf16.msra.mxu0 0
        %1022 = vmatprep.subr.bf16.mxu0 0
        %1023 = vmatpush2.bf16.msra.mxu0 0
        %1024 = vmatprep.subr.bf16.mxu0 0
        %1025 = vmatpush2.bf16.msra.mxu0 0
        %1026 = vmatprep.subr.bf16.mxu0 0
        %1027 = vmatpush2.bf16.msra.mxu0 0
        %1028 = vmatprep.mubr.bf16.mxu0 0
        %1029 = vmatmul.mubr.bf16.gmra.mxu0 %v990
        %v1030 = vpop.f32.mrf.mxu0
        %v1031 = vadd.f32 0.0, %v1030
        %v1032 = vpop.f32.mrf.mxu0
        %v1033 = vpop.f32.mrf.mxu0
        %v1034 = vpop.f32.mrf.mxu0
        %1035 = vdwg.mxu0
        %1036 = vst.msk [vmem:[#allocation2] sm:$0xff] %vm929, %v1031
        %1038 = vrot.lane.b32.xlu0 %v925, 96
        %v1039 = vpop.permute.xlu0 %1038
        %1041 = vrot.lane.b32.xlu0 %v926, 96
        %v1042 = vpop.permute.xlu0 %1041
        %v1044 = vsel %vm929, %v1039, 0
        %v1047 = vsel %vm929, %v1042, 0
        %1049 = vmatprep.subr.bf16.mxu0 0
        %1050 = vmatpush1.bf16.xpose.msra.mxu0 0
        %1051 = vmatprep.subr.bf16.mxu0 0
        %1052 = vmatpush1.bf16.xpose.msra.mxu0 0
        %1053 = vmatprep.subr.bf16.mxu0 0
        %1054 = vmatpush1.bf16.xpose.msra.mxu0 0
        %1055 = vmatprep.subr.bf16.mxu0 0
        %1056 = vmatpush1.bf16.xpose.msra.mxu0 0
        %1057 = vmatprep.subr.bf16.mxu0 0
        %1058 = vmatpush1.bf16.xpose.msra.mxu0 0
        %1059 = vmatprep.subr.bf16.mxu0 0
        %1060 = vmatpush1.bf16.xpose.msra.mxu0 0
        %1061 = vmatprep.subr.bf16.mxu0 0
        %1062 = vmatpush1.bf16.xpose.msra.mxu0 0
        %1063 = vmatprep.subr.bf16.mxu0 0
        %1064 = vmatpush1.bf16.xpose.msra.mxu0 %v1047
        %1065 = vmatprep.subr.bf16.mxu0 0
        %1066 = vmatpush2.bf16.xpose.msra.mxu0 0
        %1067 = vmatprep.subr.bf16.mxu0 0
        %1068 = vmatpush2.bf16.xpose.msra.mxu0 0
        %1069 = vmatprep.subr.bf16.mxu0 0
        %1070 = vmatpush2.bf16.xpose.msra.mxu0 0
        %1071 = vmatprep.subr.bf16.mxu0 0
        %1072 = vmatpush2.bf16.xpose.msra.mxu0 0
        %1073 = vmatprep.subr.bf16.mxu0 0
        %1074 = vmatpush2.bf16.xpose.msra.mxu0 0
        %1075 = vmatprep.subr.bf16.mxu0 0
        %1076 = vmatpush2.bf16.xpose.msra.mxu0 0
        %1077 = vmatprep.subr.bf16.mxu0 0
        %1078 = vmatpush2.bf16.xpose.msra.mxu0 0
        %1079 = vmatprep.subr.bf16.mxu0 0
        %1080 = vmatpush2.bf16.xpose.msra.mxu0 0
        %1081 = vmatprep.mubr.bf16.mxu0 0
        %1082 = vmatmul.mubr.bf16.gmra.mxu0 %v1044
        %v1083 = vpop.f32.mrf.mxu0
        %v1084 = vadd.f32 %v928, %v1083
        %v1085 = vpop.f32.mrf.mxu0
        %v1086 = vpop.f32.mrf.mxu0
        %v1087 = vpop.f32.mrf.mxu0
        %1088 = vdwg.mxu0
        %v1089 = vsel %vm976, %v1084, -inf
        %1090 = vmax.xlane.f32.xlu0 %v1089
        %v1091 = vpop.xlane.xlu0 %1090
        %v1092 = vsub.f32 %v1084, %v1091
        %v1093 = vmul.f32 %v1092, 1.442695
        %v1094 = vpow.pop %v1093
        %v1095 = vsel %vm976, %v1094, 0.0
        %1096 = vadd.xlane.f32.xlu0 %v1095
        %v1097 = vpop.xlane.xlu0 %1096
        %v1098 = vrcp.pop %v1097
        %v1099 = vmul.f32 %v1094, %v1098
        %v1100 = vpack.c.bf16 %v1099, %v1099
        %1102 = vrot.lane.b32.xlu0 %v927, 96
        %v1103 = vpop.permute.xlu0 %1102
        %v1105 = vsel %vm976, %v1100, 0
        %v1108 = vsel %vm992, %v1103, 0
        %1110 = vmatprep.subr.bf16.mxu0 0
        %1111 = vmatpush1.bf16.msra.mxu0 0
        %1112 = vmatprep.subr.bf16.mxu0 0
        %1113 = vmatpush1.bf16.msra.mxu0 0
        %1114 = vmatprep.subr.bf16.mxu0 0
        %1115 = vmatpush1.bf16.msra.mxu0 0
        %1116 = vmatprep.subr.bf16.mxu0 0
        %1117 = vmatpush1.bf16.msra.mxu0 0
        %1118 = vmatprep.subr.bf16.mxu0 0
        %1119 = vmatpush1.bf16.msra.mxu0 0
        %1120 = vmatprep.subr.bf16.mxu0 0
        %1121 = vmatpush1.bf16.msra.mxu0 0
        %1122 = vmatprep.subr.bf16.mxu0 0
        %1123 = vmatpush1.bf16.msra.mxu0 0
        %1124 = vmatprep.subr.bf16.mxu0 0
        %1125 = vmatpush1.bf16.msra.mxu0 %v1108
        %1126 = vmatprep.subr.bf16.mxu0 0
        %1127 = vmatpush2.bf16.msra.mxu0 0
        %1128 = vmatprep.subr.bf16.mxu0 0
        %1129 = vmatpush2.bf16.msra.mxu0 0
        %1130 = vmatprep.subr.bf16.mxu0 0
        %1131 = vmatpush2.bf16.msra.mxu0 0
        %1132 = vmatprep.subr.bf16.mxu0 0
        %1133 = vmatpush2.bf16.msra.mxu0 0
        %1134 = vmatprep.subr.bf16.mxu0 0
        %1135 = vmatpush2.bf16.msra.mxu0 0
        %1136 = vmatprep.subr.bf16.mxu0 0
        %1137 = vmatpush2.bf16.msra.mxu0 0
        %1138 = vmatprep.subr.bf16.mxu0 0
        %1139 = vmatpush2.bf16.msra.mxu0 0
        %1140 = vmatprep.subr.bf16.mxu0 0
        %1141 = vmatpush2.bf16.msra.mxu0 0
        %1142 = vmatprep.mubr.bf16.mxu0 0
        %1143 = vmatmul.mubr.bf16.gmra.mxu0 %v1105
        %v1144 = vpop.f32.mrf.mxu0
        %v1145 = vadd.f32 0.0, %v1144
        %v1146 = vpop.f32.mrf.mxu0
        %v1147 = vpop.f32.mrf.mxu0
        %v1148 = vpop.f32.mrf.mxu0
        %1149 = vdwg.mxu0
        %1151 = vrot.lane.b32.xlu0 %v1145, 32
        %v1152 = vpop.permute.xlu0 %1151
        %vm1154 = vcmask 523520
        %1155 = vst.msk [vmem:[#allocation2] sm:$0xff] %vm1154, %v1152
        %1156 = vrot.lane.b32.xlu0 %v925, 64
        %v1157 = vpop.permute.xlu0 %1156
        %1158 = vrot.lane.b32.xlu0 %v926, 64
        %v1159 = vpop.permute.xlu0 %1158
        %v1161 = vsel %vm929, %v1157, 0
        %v1164 = vsel %vm929, %v1159, 0
        %1166 = vmatprep.subr.bf16.mxu0 0
        %1167 = vmatpush1.bf16.xpose.msra.mxu0 0
        %1168 = vmatprep.subr.bf16.mxu0 0
        %1169 = vmatpush1.bf16.xpose.msra.mxu0 0
        %1170 = vmatprep.subr.bf16.mxu0 0
        %1171 = vmatpush1.bf16.xpose.msra.mxu0 0
        %1172 = vmatprep.subr.bf16.mxu0 0
        %1173 = vmatpush1.bf16.xpose.msra.mxu0 0
        %1174 = vmatprep.subr.bf16.mxu0 0
        %1175 = vmatpush1.bf16.xpose.msra.mxu0 0
        %1176 = vmatprep.subr.bf16.mxu0 0
        %1177 = vmatpush1.bf16.xpose.msra.mxu0 0
        %1178 = vmatprep.subr.bf16.mxu0 0
        %1179 = vmatpush1.bf16.xpose.msra.mxu0 0
        %1180 = vmatprep.subr.bf16.mxu0 0
        %1181 = vmatpush1.bf16.xpose.msra.mxu0 %v1164
        %1182 = vmatprep.subr.bf16.mxu0 0
        %1183 = vmatpush2.bf16.xpose.msra.mxu0 0
        %1184 = vmatprep.subr.bf16.mxu0 0
        %1185 = vmatpush2.bf16.xpose.msra.mxu0 0
        %1186 = vmatprep.subr.bf16.mxu0 0
        %1187 = vmatpush2.bf16.xpose.msra.mxu0 0
        %1188 = vmatprep.subr.bf16.mxu0 0
        %1189 = vmatpush2.bf16.xpose.msra.mxu0 0
        %1190 = vmatprep.subr.bf16.mxu0 0
        %1191 = vmatpush2.bf16.xpose.msra.mxu0 0
        %1192 = vmatprep.subr.bf16.mxu0 0
        %1193 = vmatpush2.bf16.xpose.msra.mxu0 0
        %1194 = vmatprep.subr.bf16.mxu0 0
        %1195 = vmatpush2.bf16.xpose.msra.mxu0 0
        %1196 = vmatprep.subr.bf16.mxu0 0
        %1197 = vmatpush2.bf16.xpose.msra.mxu0 0
        %1198 = vmatprep.mubr.bf16.mxu0 0
        %1199 = vmatmul.mubr.bf16.gmra.mxu0 %v1161
        %v1200 = vpop.f32.mrf.mxu0
        %v1201 = vadd.f32 %v928, %v1200
        %v1202 = vpop.f32.mrf.mxu0
        %v1203 = vpop.f32.mrf.mxu0
        %v1204 = vpop.f32.mrf.mxu0
        %1205 = vdwg.mxu0
        %v1206 = vsel %vm976, %v1201, -inf
        %1207 = vmax.xlane.f32.xlu0 %v1206
        %v1208 = vpop.xlane.xlu0 %1207
        %v1209 = vsub.f32 %v1201, %v1208
        %v1210 = vmul.f32 %v1209, 1.442695
        %v1211 = vpow.pop %v1210
        %v1212 = vsel %vm976, %v1211, 0.0
        %1213 = vadd.xlane.f32.xlu0 %v1212
        %v1214 = vpop.xlane.xlu0 %1213
        %v1215 = vrcp.pop %v1214
        %v1216 = vmul.f32 %v1211, %v1215
        %v1217 = vpack.c.bf16 %v1216, %v1216
        %1218 = vrot.lane.b32.xlu0 %v927, 64
        %v1219 = vpop.permute.xlu0 %1218
        %v1221 = vsel %vm976, %v1217, 0
        %v1224 = vsel %vm992, %v1219, 0
        %1226 = vmatprep.subr.bf16.mxu0 0
        %1227 = vmatpush1.bf16.msra.mxu0 0
        %1228 = vmatprep.subr.bf16.mxu0 0
        %1229 = vmatpush1.bf16.msra.mxu0 0
        %1230 = vmatprep.subr.bf16.mxu0 0
        %1231 = vmatpush1.bf16.msra.mxu0 0
        %1232 = vmatprep.subr.bf16.mxu0 0
        %1233 = vmatpush1.bf16.msra.mxu0 0
        %1234 = vmatprep.subr.bf16.mxu0 0
        %1235 = vmatpush1.bf16.msra.mxu0 0
        %1236 = vmatprep.subr.bf16.mxu0 0
        %1237 = vmatpush1.bf16.msra.mxu0 0
        %1238 = vmatprep.subr.bf16.mxu0 0
        %1239 = vmatpush1.bf16.msra.mxu0 0
        %1240 = vmatprep.subr.bf16.mxu0 0
        %1241 = vmatpush1.bf16.msra.mxu0 %v1224
        %1242 = vmatprep.subr.bf16.mxu0 0
        %1243 = vmatpush2.bf16.msra.mxu0 0
        %1244 = vmatprep.subr.bf16.mxu0 0
        %1245 = vmatpush2.bf16.msra.mxu0 0
        %1246 = vmatprep.subr.bf16.mxu0 0
        %1247 = vmatpush2.bf16.msra.mxu0 0
        %1248 = vmatprep.subr.bf16.mxu0 0
        %1249 = vmatpush2.bf16.msra.mxu0 0
        %1250 = vmatprep.subr.bf16.mxu0 0
        %1251 = vmatpush2.bf16.msra.mxu0 0
        %1252 = vmatprep.subr.bf16.mxu0 0
        %1253 = vmatpush2.bf16.msra.mxu0 0
        %1254 = vmatprep.subr.bf16.mxu0 0
        %1255 = vmatpush2.bf16.msra.mxu0 0
        %1256 = vmatprep.subr.bf16.mxu0 0
        %1257 = vmatpush2.bf16.msra.mxu0 0
        %1258 = vmatprep.mubr.bf16.mxu0 0
        %1259 = vmatmul.mubr.bf16.gmra.mxu0 %v1221
        %v1260 = vpop.f32.mrf.mxu0
        %v1261 = vadd.f32 0.0, %v1260
        %v1262 = vpop.f32.mrf.mxu0
        %v1263 = vpop.f32.mrf.mxu0
        %v1264 = vpop.f32.mrf.mxu0
        %1265 = vdwg.mxu0
        %1267 = vrot.lane.b32.xlu0 %v1261, 64
        %v1268 = vpop.permute.xlu0 %1267
        %vm1270 = vcmask 785920
        %1271 = vst.msk [vmem:[#allocation2] sm:$0xff] %vm1270, %v1268
        %1272 = vrot.lane.b32.xlu0 %v925, 32
        %v1273 = vpop.permute.xlu0 %1272
        %1274 = vrot.lane.b32.xlu0 %v926, 32
        %v1275 = vpop.permute.xlu0 %1274
        %v1277 = vsel %vm929, %v1273, 0
        %v1280 = vsel %vm929, %v1275, 0
        %1282 = vmatprep.subr.bf16.mxu0 0
        %1283 = vmatpush1.bf16.xpose.msra.mxu0 0
        %1284 = vmatprep.subr.bf16.mxu0 0
        %1285 = vmatpush1.bf16.xpose.msra.mxu0 0
        %1286 = vmatprep.subr.bf16.mxu0 0
        %1287 = vmatpush1.bf16.xpose.msra.mxu0 0
        %1288 = vmatprep.subr.bf16.mxu0 0
        %1289 = vmatpush1.bf16.xpose.msra.mxu0 0
        %1290 = vmatprep.subr.bf16.mxu0 0
        %1291 = vmatpush1.bf16.xpose.msra.mxu0 0
        %1292 = vmatprep.subr.bf16.mxu0 0
        %1293 = vmatpush1.bf16.xpose.msra.mxu0 0
        %1294 = vmatprep.subr.bf16.mxu0 0
        %1295 = vmatpush1.bf16.xpose.msra.mxu0 0
        %1296 = vmatprep.subr.bf16.mxu0 0
        %1297 = vmatpush1.bf16.xpose.msra.mxu0 %v1280
        %1298 = vmatprep.subr.bf16.mxu0 0
        %1299 = vmatpush2.bf16.xpose.msra.mxu0 0
        %1300 = vmatprep.subr.bf16.mxu0 0
        %1301 = vmatpush2.bf16.xpose.msra.mxu0 0
        %1302 = vmatprep.subr.bf16.mxu0 0
        %1303 = vmatpush2.bf16.xpose.msra.mxu0 0
        %1304 = vmatprep.subr.bf16.mxu0 0
        %1305 = vmatpush2.bf16.xpose.msra.mxu0 0
        %1306 = vmatprep.subr.bf16.mxu0 0
        %1307 = vmatpush2.bf16.xpose.msra.mxu0 0
        %1308 = vmatprep.subr.bf16.mxu0 0
        %1309 = vmatpush2.bf16.xpose.msra.mxu0 0
        %1310 = vmatprep.subr.bf16.mxu0 0
        %1311 = vmatpush2.bf16.xpose.msra.mxu0 0
        %1312 = vmatprep.subr.bf16.mxu0 0
        %1313 = vmatpush2.bf16.xpose.msra.mxu0 0
        %1314 = vmatprep.mubr.bf16.mxu0 0
        %1315 = vmatmul.mubr.bf16.gmra.mxu0 %v1277
        %v1316 = vpop.f32.mrf.mxu0
        %v1317 = vadd.f32 %v928, %v1316
        %v1318 = vpop.f32.mrf.mxu0
        %v1319 = vpop.f32.mrf.mxu0
        %v1320 = vpop.f32.mrf.mxu0
        %1321 = vdwg.mxu0
        %v1322 = vsel %vm976, %v1317, -inf
        %1323 = vmax.xlane.f32.xlu0 %v1322
        %v1324 = vpop.xlane.xlu0 %1323
        %v1325 = vsub.f32 %v1317, %v1324
        %v1326 = vmul.f32 %v1325, 1.442695
        %v1327 = vpow.pop %v1326
        %v1328 = vsel %vm976, %v1327, 0.0
        %1329 = vadd.xlane.f32.xlu0 %v1328
        %v1330 = vpop.xlane.xlu0 %1329
        %v1331 = vrcp.pop %v1330
        %v1332 = vmul.f32 %v1327, %v1331
        %v1333 = vpack.c.bf16 %v1332, %v1332
        %1334 = vrot.lane.b32.xlu0 %v927, 32
        %v1335 = vpop.permute.xlu0 %1334
        %v1337 = vsel %vm976, %v1333, 0
        %v1340 = vsel %vm992, %v1335, 0
        %1342 = vmatprep.subr.bf16.mxu0 0
        %1343 = vmatpush1.bf16.msra.mxu0 0
        %1344 = vmatprep.subr.bf16.mxu0 0
        %1345 = vmatpush1.bf16.msra.mxu0 0
        %1346 = vmatprep.subr.bf16.mxu0 0
        %1347 = vmatpush1.bf16.msra.mxu0 0
        %1348 = vmatprep.subr.bf16.mxu0 0
        %1349 = vmatpush1.bf16.msra.mxu0 0
        %1350 = vmatprep.subr.bf16.mxu0 0
        %1351 = vmatpush1.bf16.msra.mxu0 0
        %1352 = vmatprep.subr.bf16.mxu0 0
        %1353 = vmatpush1.bf16.msra.mxu0 0
        %1354 = vmatprep.subr.bf16.mxu0 0
        %1355 = vmatpush1.bf16.msra.mxu0 0
        %1356 = vmatprep.subr.bf16.mxu0 0
        %1357 = vmatpush1.bf16.msra.mxu0 %v1340
        %1358 = vmatprep.subr.bf16.mxu0 0
        %1359 = vmatpush2.bf16.msra.mxu0 0
        %1360 = vmatprep.subr.bf16.mxu0 0
        %1361 = vmatpush2.bf16.msra.mxu0 0
        %1362 = vmatprep.subr.bf16.mxu0 0
        %1363 = vmatpush2.bf16.msra.mxu0 0
        %1364 = vmatprep.subr.bf16.mxu0 0
        %1365 = vmatpush2.bf16.msra.mxu0 0
        %1366 = vmatprep.subr.bf16.mxu0 0
        %1367 = vmatpush2.bf16.msra.mxu0 0
        %1368 = vmatprep.subr.bf16.mxu0 0
        %1369 = vmatpush2.bf16.msra.mxu0 0
        %1370 = vmatprep.subr.bf16.mxu0 0
        %1371 = vmatpush2.bf16.msra.mxu0 0
        %1372 = vmatprep.subr.bf16.mxu0 0
        %1373 = vmatpush2.bf16.msra.mxu0 0
        %1374 = vmatprep.mubr.bf16.mxu0 0
        %1375 = vmatmul.mubr.bf16.gmra.mxu0 %v1337
        %v1376 = vpop.f32.mrf.mxu0
        %v1377 = vadd.f32 0.0, %v1376
        %v1378 = vpop.f32.mrf.mxu0
        %v1379 = vpop.f32.mrf.mxu0
        %v1380 = vpop.f32.mrf.mxu0
        %1381 = vdwg.mxu0
        %1383 = vrot.lane.b32.xlu0 %v1377, 96
        %v1384 = vpop.permute.xlu0 %1383
        %vm1386 = vcmask 1048320
        %1387 = vst.msk [vmem:[#allocation2] sm:$0xff] %vm1386, %v1384
        %v1388 = vld [vmem:[#allocation2] sm:$0xff]
        %v1389 = vpack.c.bf16 %v1388, %v1388
        %v1390 = vld [vmem:[#allocation12] sm:$0xf]
        %v1391 = vld [vmem:[#allocation12 + $0x4] sm:$0xf]
        %v1392 = vld [vmem:[#allocation12 + $0x8] sm:$0xf]
        %v1393 = vld [vmem:[#allocation12 + $0xc] sm:$0xf]
        %v1394 = vld [vmem:[#allocation12 + $0x10] sm:$0xf]
        %v1395 = vld [vmem:[#allocation12 + $0x14] sm:$0xf]
        %v1396 = vld [vmem:[#allocation12 + $0x18] sm:$0xf]
        %v1397 = vld [vmem:[#allocation12 + $0x1c] sm:$0xf]
        %v1398 = vld [vmem:[#allocation12 + $0x20] sm:$0xf]
        %v1399 = vld [vmem:[#allocation12 + $0x24] sm:$0xf]
        %v1400 = vld [vmem:[#allocation12 + $0x28] sm:$0xf]
        %v1401 = vld [vmem:[#allocation12 + $0x2c] sm:$0xf]
        %v1402 = vld [vmem:[#allocation12 + $0x30] sm:$0xf]
        %v1403 = vld [vmem:[#allocation12 + $0x34] sm:$0xf]
        %v1404 = vld [vmem:[#allocation12 + $0x38] sm:$0xf]
        %v1405 = vld [vmem:[#allocation12 + $0x3c] sm:$0xf]
        %v1406 = vld [vmem:[%s6] sm:$0x1]
        %v1408 = vlaneseq
        %v1409 = vshrl.u32 %v1408, 7
        %v1410 = vsub.s32 0, %v1409
        %v1411 = vrot.slane %v1406, %v1410
        %v1429 = vunpack.c.l.b16 %v1390
        %v1430 = vunpack.c.l.b16 %v1391
        %v1431 = vunpack.c.l.b16 %v1392
        %v1432 = vunpack.c.l.b16 %v1393
        %v1433 = vunpack.c.l.b16 %v1394
        %v1434 = vunpack.c.l.b16 %v1395
        %v1435 = vunpack.c.l.b16 %v1396
        %v1436 = vunpack.c.l.b16 %v1397
        %v1437 = vunpack.c.l.b16 %v1398
        %v1438 = vunpack.c.l.b16 %v1399
        %v1439 = vunpack.c.l.b16 %v1400
        %v1440 = vunpack.c.l.b16 %v1401
        %v1441 = vunpack.c.l.b16 %v1402
        %v1442 = vunpack.c.l.b16 %v1403
        %v1443 = vunpack.c.l.b16 %v1404
        %v1444 = vunpack.c.l.b16 %v1405
        %v1445 = vpack.c.b16 %v1430, %v1429
        %v1446 = vpack.c.b16 %v1432, %v1431
        %v1447 = vpack.c.b16 %v1434, %v1433
        %v1448 = vpack.c.b16 %v1436, %v1435
        %v1449 = vpack.c.b16 %v1438, %v1437
        %v1450 = vpack.c.b16 %v1440, %v1439
        %v1451 = vpack.c.b16 %v1442, %v1441
        %v1452 = vpack.c.b16 %v1444, %v1443
        %1461 = vmatprep.subr.bf16.mxu0 0
        %1462 = vmatpush1.bf16.msra.mxu0 %v1452
        %1463 = vmatprep.subr.bf16.mxu0 0
        %1464 = vmatpush1.bf16.msra.mxu0 %v1451
        %1465 = vmatprep.subr.bf16.mxu0 0
        %1466 = vmatpush1.bf16.msra.mxu0 %v1450
        %1467 = vmatprep.subr.bf16.mxu0 0
        %1468 = vmatpush1.bf16.msra.mxu0 %v1449
        %1469 = vmatprep.subr.bf16.mxu0 0
        %1470 = vmatpush1.bf16.msra.mxu0 %v1448
        %1471 = vmatprep.subr.bf16.mxu0 0
        %1472 = vmatpush1.bf16.msra.mxu0 %v1447
        %1473 = vmatprep.subr.bf16.mxu0 0
        %1474 = vmatpush1.bf16.msra.mxu0 %v1446
        %1475 = vmatprep.subr.bf16.mxu0 0
        %1476 = vmatpush1.bf16.msra.mxu0 %v1445
        %1477 = vmatprep.subr.bf16.mxu0 0
        %1478 = vmatpush2.bf16.msra.mxu0 0
        %1479 = vmatprep.subr.bf16.mxu0 0
        %1480 = vmatpush2.bf16.msra.mxu0 0
        %1481 = vmatprep.subr.bf16.mxu0 0
        %1482 = vmatpush2.bf16.msra.mxu0 0
        %1483 = vmatprep.subr.bf16.mxu0 0
        %1484 = vmatpush2.bf16.msra.mxu0 0
        %1485 = vmatprep.subr.bf16.mxu0 0
        %1486 = vmatpush2.bf16.msra.mxu0 0
        %1487 = vmatprep.subr.bf16.mxu0 0
        %1488 = vmatpush2.bf16.msra.mxu0 0
        %1489 = vmatprep.subr.bf16.mxu0 0
        %1490 = vmatpush2.bf16.msra.mxu0 0
        %1491 = vmatprep.subr.bf16.mxu0 0
        %1492 = vmatpush2.bf16.msra.mxu0 0
        %1493 = vmatprep.mubr.bf16.mxu0 0
        %1494 = vmatmul.mubr.bf16.gmra.mxu0 %v1389
        %v1495 = vpop.f32.mrf.mxu0
        %v1496 = vadd.f32 %v1411, %v1495
        %v1497 = vpop.f32.mrf.mxu0
        %v1498 = vpop.f32.mrf.mxu0
        %v1499 = vpop.f32.mrf.mxu0
        %1500 = vdwg.mxu0
        %v1501 = vadd.f32 %v611, %v1496
        %v1502 = vld [vmem:[%s7] sm:$0x1]
        %v1503 = vld [vmem:[%s8] sm:$0x1]
        %1504 = vadd.xlane.f32.xlu0 %v1501
        %v1505 = vpop.xlane.xlu0 %1504
        %v1506 = vrcp.pop 128.0
        %v1507 = vmul.f32 %v1505, %v1506
        %v1508 = vsub.f32 %v1501, %v1507
        %v1509 = vmul.f32 %v1508, %v1508
        %1510 = vadd.xlane.f32.xlu0 %v1509
        %v1511 = vpop.xlane.xlu0 %1510
        %v1512 = vmul.f32 %v1511, %v1506
        %v1513 = vadd.f32 %v1512, 1e-05
        %v1514 = vrsqrt.pop %v1513
        %v1515 = vmul.f32 %v1508, %v1514
        %v1517 = vlaneseq
        %v1518 = vshrl.u32 %v1517, 7
        %v1519 = vsub.s32 0, %v1518
        %v1520 = vrot.slane %v1502, %v1519
        %v1522 = vmul.f32 %v1515, %v1520
        %v1524 = vlaneseq
        %v1525 = vshrl.u32 %v1524, 7
        %v1526 = vsub.s32 0, %v1525
        %v1527 = vrot.slane %v1503, %v1526
        %v1529 = vadd.f32 %v1522, %v1527
        %v1530 = vpack.c.bf16 %v1529, %v1529
        %v1531 = vld [vmem:[#allocation14] sm:$0xff]
        %v1532 = vld [vmem:[#allocation14 + $0x8] sm:$0xff]
        %v1533 = vld [vmem:[#allocation14 + $0x10] sm:$0xff]
        %v1534 = vld [vmem:[#allocation14 + $0x18] sm:$0xff]
        %v1535 = vld [vmem:[#allocation14 + $0x20] sm:$0xff]
        %v1536 = vld [vmem:[#allocation14 + $0x28] sm:$0xff]
        %v1537 = vld [vmem:[#allocation14 + $0x30] sm:$0xff]
        %v1538 = vld [vmem:[#allocation14 + $0x38] sm:$0xff]
        %v1539 = vld [vmem:[#allocation14 + $0x40] sm:$0xff]
        %v1540 = vld [vmem:[#allocation14 + $0x48] sm:$0xff]
        %v1541 = vld [vmem:[#allocation14 + $0x50] sm:$0xff]
        %v1542 = vld [vmem:[#allocation14 + $0x58] sm:$0xff]
        %v1543 = vld [vmem:[#allocation14 + $0x60] sm:$0xff]
        %v1544 = vld [vmem:[#allocation14 + $0x68] sm:$0xff]
        %v1545 = vld [vmem:[#allocation14 + $0x70] sm:$0xff]
        %v1546 = vld [vmem:[#allocation14 + $0x78] sm:$0xff]
        %v1547 = vld [vmem:[#allocation14 + $0x80] sm:$0xff]
        %v1548 = vld [vmem:[#allocation14 + $0x88] sm:$0xff]
        %v1549 = vld [vmem:[#allocation14 + $0x90] sm:$0xff]
        %v1550 = vld [vmem:[#allocation14 + $0x98] sm:$0xff]
        %v1551 = vld [vmem:[#allocation14 + $0xa0] sm:$0xff]
        %v1552 = vld [vmem:[#allocation14 + $0xa8] sm:$0xff]
        %v1553 = vld [vmem:[#allocation14 + $0xb0] sm:$0xff]
        %v1554 = vld [vmem:[#allocation14 + $0xb8] sm:$0xff]
        %v1555 = vld [vmem:[#allocation14 + $0xc0] sm:$0xff]
        %v1556 = vld [vmem:[#allocation14 + $0xc8] sm:$0xff]
        %v1557 = vld [vmem:[#allocation14 + $0xd0] sm:$0xff]
        %v1558 = vld [vmem:[#allocation14 + $0xd8] sm:$0xff]
        %v1559 = vld [vmem:[#allocation14 + $0xe0] sm:$0xff]
        %v1560 = vld [vmem:[#allocation14 + $0xe8] sm:$0xff]
        %v1561 = vld [vmem:[#allocation14 + $0xf0] sm:$0xff]
        %v1562 = vld [vmem:[#allocation14 + $0xf8] sm:$0xff]
        %v1563 = vld [vmem:[%s10] sm:$0xf]
        %v1565 = vlaneseq
        %v1566 = vshrl.u32 %v1565, 7
        %v1567 = vsub.s32 0, %v1566
        %v1568 = vrot.slane %v1563, %v1567
        %v1569 = vlaneseq
        %v1570 = vshrl.u32 %v1569, 7
        %v1571 = vsub.s32 1, %v1570
        %v1572 = vrot.slane %v1563, %v1571
        %v1573 = vlaneseq
        %v1574 = vshrl.u32 %v1573, 7
        %v1575 = vsub.s32 2, %v1574
        %v1576 = vrot.slane %v1563, %v1575
        %v1577 = vlaneseq
        %v1578 = vshrl.u32 %v1577, 7
        %v1579 = vsub.s32 3, %v1578
        %v1580 = vrot.slane %v1563, %v1579
        %v1617 = vunpack.c.l.b16 %v1531
        %v1618 = vunpack.c.h.b16 %v1531
        %v1619 = vunpack.c.l.b16 %v1532
        %v1620 = vunpack.c.h.b16 %v1532
        %v1621 = vunpack.c.l.b16 %v1533
        %v1622 = vunpack.c.h.b16 %v1533
        %v1623 = vunpack.c.l.b16 %v1534
        %v1624 = vunpack.c.h.b16 %v1534
        %v1625 = vunpack.c.l.b16 %v1535
        %v1626 = vunpack.c.h.b16 %v1535
        %v1627 = vunpack.c.l.b16 %v1536
        %v1628 = vunpack.c.h.b16 %v1536
        %v1629 = vunpack.c.l.b16 %v1537
        %v1630 = vunpack.c.h.b16 %v1537
        %v1631 = vunpack.c.l.b16 %v1538
        %v1632 = vunpack.c.h.b16 %v1538
        %v1633 = vunpack.c.l.b16 %v1539
        %v1634 = vunpack.c.h.b16 %v1539
        %v1635 = vunpack.c.l.b16 %v1540
        %v1636 = vunpack.c.h.b16 %v1540
        %v1637 = vunpack.c.l.b16 %v1541
        %v1638 = vunpack.c.h.b16 %v1541
        %v1639 = vunpack.c.l.b16 %v1542
        %v1640 = vunpack.c.h.b16 %v1542
        %v1641 = vunpack.c.l.b16 %v1543
        %v1642 = vunpack.c.h.b16 %v1543
        %v1643 = vunpack.c.l.b16 %v1544
        %v1644 = vunpack.c.h.b16 %v1544
        %v1645 = vunpack.c.l.b16 %v1545
        %v1646 = vunpack.c.h.b16 %v1545
        %v1647 = vunpack.c.l.b16 %v1546
        %v1648 = vunpack.c.h.b16 %v1546
        %v1649 = vunpack.c.l.b16 %v1547
        %v1650 = vunpack.c.h.b16 %v1547
        %v1651 = vunpack.c.l.b16 %v1548
        %v1652 = vunpack.c.h.b16 %v1548
        %v1653 = vunpack.c.l.b16 %v1549
        %v1654 = vunpack.c.h.b16 %v1549
        %v1655 = vunpack.c.l.b16 %v1550
        %v1656 = vunpack.c.h.b16 %v1550
        %v1657 = vunpack.c.l.b16 %v1551
        %v1658 = vunpack.c.h.b16 %v1551
        %v1659 = vunpack.c.l.b16 %v1552
        %v1660 = vunpack.c.h.b16 %v1552
        %v1661 = vunpack.c.l.b16 %v1553
        %v1662 = vunpack.c.h.b16 %v1553
        %v1663 = vunpack.c.l.b16 %v1554
        %v1664 = vunpack.c.h.b16 %v1554
        %v1665 = vunpack.c.l.b16 %v1555
        %v1666 = vunpack.c.h.b16 %v1555
        %v1667 = vunpack.c.l.b16 %v1556
        %v1668 = vunpack.c.h.b16 %v1556
        %v1669 = vunpack.c.l.b16 %v1557
        %v1670 = vunpack.c.h.b16 %v1557
        %v1671 = vunpack.c.l.b16 %v1558
        %v1672 = vunpack.c.h.b16 %v1558
        %v1673 = vunpack.c.l.b16 %v1559
        %v1674 = vunpack.c.h.b16 %v1559
        %v1675 = vunpack.c.l.b16 %v1560
        %v1676 = vunpack.c.h.b16 %v1560
        %v1677 = vunpack.c.l.b16 %v1561
        %v1678 = vunpack.c.h.b16 %v1561
        %v1679 = vunpack.c.l.b16 %v1562
        %v1680 = vunpack.c.h.b16 %v1562
        %v1681 = vpack.c.b16 %v1621, %v1617
        %v1682 = vpack.c.b16 %v1622, %v1618
        %v1683 = vpack.c.b16 %v1623, %v1619
        %v1684 = vpack.c.b16 %v1624, %v1620
        %v1685 = vpack.c.b16 %v1629, %v1625
        %v1686 = vpack.c.b16 %v1630, %v1626
        %v1687 = vpack.c.b16 %v1631, %v1627
        %v1688 = vpack.c.b16 %v1632, %v1628
        %v1689 = vpack.c.b16 %v1637, %v1633
        %v1690 = vpack.c.b16 %v1638, %v1634
        %v1691 = vpack.c.b16 %v1639, %v1635
        %v1692 = vpack.c.b16 %v1640, %v1636
        %v1693 = vpack.c.b16 %v1645, %v1641
        %v1694 = vpack.c.b16 %v1646, %v1642
        %v1695 = vpack.c.b16 %v1647, %v1643
        %v1696 = vpack.c.b16 %v1648, %v1644
        %v1697 = vpack.c.b16 %v1653, %v1649
        %v1698 = vpack.c.b16 %v1654, %v1650
        %v1699 = vpack.c.b16 %v1655, %v1651
        %v1700 = vpack.c.b16 %v1656, %v1652
        %v1701 = vpack.c.b16 %v1661, %v1657
        %v1702 = vpack.c.b16 %v1662, %v1658
        %v1703 = vpack.c.b16 %v1663, %v1659
        %v1704 = vpack.c.b16 %v1664, %v1660
        %v1705 = vpack.c.b16 %v1669, %v1665
        %v1706 = vpack.c.b16 %v1670, %v1666
        %v1707 = vpack.c.b16 %v1671, %v1667
        %v1708 = vpack.c.b16 %v1672, %v1668
        %v1709 = vpack.c.b16 %v1677, %v1673
        %v1710 = vpack.c.b16 %v1678, %v1674
        %v1711 = vpack.c.b16 %v1679, %v1675
        %v1712 = vpack.c.b16 %v1680, %v1676
        %1745 = vmatprep.subr.bf16.mxu0 %v1710
        %1746 = vmatpush1.bf16.msra.mxu0 %v1709
        %1747 = vmatprep.subr.bf16.mxu0 %v1706
        %1748 = vmatpush1.bf16.msra.mxu0 %v1705
        %1749 = vmatprep.subr.bf16.mxu0 %v1702
        %1750 = vmatpush1.bf16.msra.mxu0 %v1701
        %1751 = vmatprep.subr.bf16.mxu0 %v1698
        %1752 = vmatpush1.bf16.msra.mxu0 %v1697
        %1753 = vmatprep.subr.bf16.mxu0 %v1694
        %1754 = vmatpush1.bf16.msra.mxu0 %v1693
        %1755 = vmatprep.subr.bf16.mxu0 %v1690
        %1756 = vmatpush1.bf16.msra.mxu0 %v1689
        %1757 = vmatprep.subr.bf16.mxu0 %v1686
        %1758 = vmatpush1.bf16.msra.mxu0 %v1685
        %1759 = vmatprep.subr.bf16.mxu0 %v1682
        %1760 = vmatpush1.bf16.msra.mxu0 %v1681
        %1761 = vmatprep.subr.bf16.mxu0 0
        %1762 = vmatpush2.bf16.msra.mxu0 0
        %1763 = vmatprep.subr.bf16.mxu0 0
        %1764 = vmatpush2.bf16.msra.mxu0 0
        %1765 = vmatprep.subr.bf16.mxu0 0
        %1766 = vmatpush2.bf16.msra.mxu0 0
        %1767 = vmatprep.subr.bf16.mxu0 0
        %1768 = vmatpush2.bf16.msra.mxu0 0
        %1769 = vmatprep.subr.bf16.mxu0 0
        %1770 = vmatpush2.bf16.msra.mxu0 0
        %1771 = vmatprep.subr.bf16.mxu0 0
        %1772 = vmatpush2.bf16.msra.mxu0 0
        %1773 = vmatprep.subr.bf16.mxu0 0
        %1774 = vmatpush2.bf16.msra.mxu0 0
        %1775 = vmatprep.subr.bf16.mxu0 0
        %1776 = vmatpush2.bf16.msra.mxu0 0
        %1777 = vmatprep.mubr.bf16.mxu0 0
        %1778 = vmatmul.mubr.bf16.gmra.mxu0 %v1530
        %v1779 = vpop.f32.mrf.mxu0
        %v1780 = vadd.f32 %v1568, %v1779
        %v1781 = vpop.f32.mrf.mxu0
        %v1782 = vadd.f32 %v1572, %v1781
        %v1783 = vpop.f32.mrf.mxu0
        %v1784 = vpop.f32.mrf.mxu0
        %1785 = vdwg.mxu0
        %1786 = vmatprep.subr.bf16.mxu0 %v1712
        %1787 = vmatpush1.bf16.msra.mxu0 %v1711
        %1788 = vmatprep.subr.bf16.mxu0 %v1708
        %1789 = vmatpush1.bf16.msra.mxu0 %v1707
        %1790 = vmatprep.subr.bf16.mxu0 %v1704
        %1791 = vmatpush1.bf16.msra.mxu0 %v1703
        %1792 = vmatprep.subr.bf16.mxu0 %v1700
        %1793 = vmatpush1.bf16.msra.mxu0 %v1699
        %1794 = vmatprep.subr.bf16.mxu0 %v1696
        %1795 = vmatpush1.bf16.msra.mxu0 %v1695
        %1796 = vmatprep.subr.bf16.mxu0 %v1692
        %1797 = vmatpush1.bf16.msra.mxu0 %v1691
        %1798 = vmatprep.subr.bf16.mxu0 %v1688
        %1799 = vmatpush1.bf16.msra.mxu0 %v1687
        %1800 = vmatprep.subr.bf16.mxu0 %v1684
        %1801 = vmatpush1.bf16.msra.mxu0 %v1683
        %1802 = vmatprep.subr.bf16.mxu0 0
        %1803 = vmatpush2.bf16.msra.mxu0 0
        %1804 = vmatprep.subr.bf16.mxu0 0
        %1805 = vmatpush2.bf16.msra.mxu0 0
        %1806 = vmatprep.subr.bf16.mxu0 0
        %1807 = vmatpush2.bf16.msra.mxu0 0
        %1808 = vmatprep.subr.bf16.mxu0 0
        %1809 = vmatpush2.bf16.msra.mxu0 0
        %1810 = vmatprep.subr.bf16.mxu0 0
        %1811 = vmatpush2.bf16.msra.mxu0 0
        %1812 = vmatprep.subr.bf16.mxu0 0
        %1813 = vmatpush2.bf16.msra.mxu0 0
        %1814 = vmatprep.subr.bf16.mxu0 0
        %1815 = vmatpush2.bf16.msra.mxu0 0
        %1816 = vmatprep.subr.bf16.mxu0 0
        %1817 = vmatpush2.bf16.msra.mxu0 0
        %1818 = vmatprep.mubr.bf16.mxu0 0
        %1819 = vmatmul.mubr.bf16.gmra.mxu0 %v1530
        %v1820 = vpop.f32.mrf.mxu0
        %v1821 = vadd.f32 %v1576, %v1820
        %v1822 = vpop.f32.mrf.mxu0
        %v1823 = vadd.f32 %v1580, %v1822
        %v1824 = vpop.f32.mrf.mxu0
        %v1825 = vpop.f32.mrf.mxu0
        %1826 = vdwg.mxu0
        %v1827 = vmax.f32 %v1780, 0.0
        %v1828 = vmax.f32 %v1782, 0.0
        %v1829 = vmax.f32 %v1821, 0.0
        %v1830 = vmax.f32 %v1823, 0.0
        %v1831 = vpack.c.bf16 %v1827, %v1827
        %v1832 = vpack.c.bf16 %v1828, %v1828
        %v1833 = vpack.c.bf16 %v1829, %v1829
        %v1834 = vpack.c.bf16 %v1830, %v1830
        %v1835 = vld [vmem:[#allocation15] sm:$0xf]
        %v1836 = vld [vmem:[#allocation15 + $0x4] sm:$0xf]
        %v1837 = vld [vmem:[#allocation15 + $0x8] sm:$0xf]
        %v1838 = vld [vmem:[#allocation15 + $0xc] sm:$0xf]
        %v1839 = vld [vmem:[#allocation15 + $0x10] sm:$0xf]
        %v1840 = vld [vmem:[#allocation15 + $0x14] sm:$0xf]
        %v1841 = vld [vmem:[#allocation15 + $0x18] sm:$0xf]
        %v1842 = vld [vmem:[#allocation15 + $0x1c] sm:$0xf]
        %v1843 = vld [vmem:[#allocation15 + $0x20] sm:$0xf]
        %v1844 = vld [vmem:[#allocation15 + $0x24] sm:$0xf]
        %v1845 = vld [vmem:[#allocation15 + $0x28] sm:$0xf]
        %v1846 = vld [vmem:[#allocation15 + $0x2c] sm:$0xf]
        %v1847 = vld [vmem:[#allocation15 + $0x30] sm:$0xf]
        %v1848 = vld [vmem:[#allocation15 + $0x34] sm:$0xf]
        %v1849 = vld [vmem:[#allocation15 + $0x38] sm:$0xf]
        %v1850 = vld [vmem:[#allocation15 + $0x3c] sm:$0xf]
        %v1851 = vld [vmem:[#allocation15 + $0x40] sm:$0xf]
        %v1852 = vld [vmem:[#allocation15 + $0x44] sm:$0xf]
        %v1853 = vld [vmem:[#allocation15 + $0x48] sm:$0xf]
        %v1854 = vld [vmem:[#allocation15 + $0x4c] sm:$0xf]
        %v1855 = vld [vmem:[#allocation15 + $0x50] sm:$0xf]
        %v1856 = vld [vmem:[#allocation15 + $0x54] sm:$0xf]
        %v1857 = vld [vmem:[#allocation15 + $0x58] sm:$0xf]
        %v1858 = vld [vmem:[#allocation15 + $0x5c] sm:$0xf]
        %v1859 = vld [vmem:[#allocation15 + $0x60] sm:$0xf]
        %v1860 = vld [vmem:[#allocation15 + $0x64] sm:$0xf]
        %v1861 = vld [vmem:[#allocation15 + $0x68] sm:$0xf]
        %v1862 = vld [vmem:[#allocation15 + $0x6c] sm:$0xf]
        %v1863 = vld [vmem:[#allocation15 + $0x70] sm:$0xf]
        %v1864 = vld [vmem:[#allocation15 + $0x74] sm:$0xf]
        %v1865 = vld [vmem:[#allocation15 + $0x78] sm:$0xf]
        %v1866 = vld [vmem:[#allocation15 + $0x7c] sm:$0xf]
        %v1867 = vld [vmem:[#allocation15 + $0x80] sm:$0xf]
        %v1868 = vld [vmem:[#allocation15 + $0x84] sm:$0xf]
        %v1869 = vld [vmem:[#allocation15 + $0x88] sm:$0xf]
        %v1870 = vld [vmem:[#allocation15 + $0x8c] sm:$0xf]
        %v1871 = vld [vmem:[#allocation15 + $0x90] sm:$0xf]
        %v1872 = vld [vmem:[#allocation15 + $0x94] sm:$0xf]
        %v1873 = vld [vmem:[#allocation15 + $0x98] sm:$0xf]
        %v1874 = vld [vmem:[#allocation15 + $0x9c] sm:$0xf]
        %v1875 = vld [vmem:[#allocation15 + $0xa0] sm:$0xf]
        %v1876 = vld [vmem:[#allocation15 + $0xa4] sm:$0xf]
        %v1877 = vld [vmem:[#allocation15 + $0xa8] sm:$0xf]
        %v1878 = vld [vmem:[#allocation15 + $0xac] sm:$0xf]
        %v1879 = vld [vmem:[#allocation15 + $0xb0] sm:$0xf]
        %v1880 = vld [vmem:[#allocation15 + $0xb4] sm:$0xf]
        %v1881 = vld [vmem:[#allocation15 + $0xb8] sm:$0xf]
        %v1882 = vld [vmem:[#allocation15 + $0xbc] sm:$0xf]
        %v1883 = vld [vmem:[#allocation15 + $0xc0] sm:$0xf]
        %v1884 = vld [vmem:[#allocation15 + $0xc4] sm:$0xf]
        %v1885 = vld [vmem:[#allocation15 + $0xc8] sm:$0xf]
        %v1886 = vld [vmem:[#allocation15 + $0xcc] sm:$0xf]
        %v1887 = vld [vmem:[#allocation15 + $0xd0] sm:$0xf]
        %v1888 = vld [vmem:[#allocation15 + $0xd4] sm:$0xf]
        %v1889 = vld [vmem:[#allocation15 + $0xd8] sm:$0xf]
        %v1890 = vld [vmem:[#allocation15 + $0xdc] sm:$0xf]
        %v1891 = vld [vmem:[#allocation15 + $0xe0] sm:$0xf]
        %v1892 = vld [vmem:[#allocation15 + $0xe4] sm:$0xf]
        %v1893 = vld [vmem:[#allocation15 + $0xe8] sm:$0xf]
        %v1894 = vld [vmem:[#allocation15 + $0xec] sm:$0xf]
        %v1895 = vld [vmem:[#allocation15 + $0xf0] sm:$0xf]
        %v1896 = vld [vmem:[#allocation15 + $0xf4] sm:$0xf]
        %v1897 = vld [vmem:[#allocation15 + $0xf8] sm:$0xf]
        %v1898 = vld [vmem:[#allocation15 + $0xfc] sm:$0xf]
        %v1899 = vld [vmem:[%s12] sm:$0x1]
        %v1901 = vlaneseq
        %v1902 = vshrl.u32 %v1901, 7
        %v1903 = vsub.s32 0, %v1902
        %v1904 = vrot.slane %v1899, %v1903
        %v1970 = vunpack.c.l.b16 %v1835
        %v1971 = vunpack.c.l.b16 %v1836
        %v1972 = vunpack.c.l.b16 %v1837
        %v1973 = vunpack.c.l.b16 %v1838
        %v1974 = vunpack.c.l.b16 %v1839
        %v1975 = vunpack.c.l.b16 %v1840
        %v1976 = vunpack.c.l.b16 %v1841
        %v1977 = vunpack.c.l.b16 %v1842
        %v1978 = vunpack.c.l.b16 %v1843
        %v1979 = vunpack.c.l.b16 %v1844
        %v1980 = vunpack.c.l.b16 %v1845
        %v1981 = vunpack.c.l.b16 %v1846
        %v1982 = vunpack.c.l.b16 %v1847
        %v1983 = vunpack.c.l.b16 %v1848
        %v1984 = vunpack.c.l.b16 %v1849
        %v1985 = vunpack.c.l.b16 %v1850
        %v1986 = vunpack.c.l.b16 %v1851
        %v1987 = vunpack.c.l.b16 %v1852
        %v1988 = vunpack.c.l.b16 %v1853
        %v1989 = vunpack.c.l.b16 %v1854
        %v1990 = vunpack.c.l.b16 %v1855
        %v1991 = vunpack.c.l.b16 %v1856
        %v1992 = vunpack.c.l.b16 %v1857
        %v1993 = vunpack.c.l.b16 %v1858
        %v1994 = vunpack.c.l.b16 %v1859
        %v1995 = vunpack.c.l.b16 %v1860
        %v1996 = vunpack.c.l.b16 %v1861
        %v1997 = vunpack.c.l.b16 %v1862
        %v1998 = vunpack.c.l.b16 %v1863
        %v1999 = vunpack.c.l.b16 %v1864
        %v2000 = vunpack.c.l.b16 %v1865
        %v2001 = vunpack.c.l.b16 %v1866
        %v2002 = vunpack.c.l.b16 %v1867
        %v2003 = vunpack.c.l.b16 %v1868
        %v2004 = vunpack.c.l.b16 %v1869
        %v2005 = vunpack.c.l.b16 %v1870
        %v2006 = vunpack.c.l.b16 %v1871
        %v2007 = vunpack.c.l.b16 %v1872
        %v2008 = vunpack.c.l.b16 %v1873
        %v2009 = vunpack.c.l.b16 %v1874
        %v2010 = vunpack.c.l.b16 %v1875
        %v2011 = vunpack.c.l.b16 %v1876
        %v2012 = vunpack.c.l.b16 %v1877
        %v2013 = vunpack.c.l.b16 %v1878
        %v2014 = vunpack.c.l.b16 %v1879
        %v2015 = vunpack.c.l.b16 %v1880
        %v2016 = vunpack.c.l.b16 %v1881
        %v2017 = vunpack.c.l.b16 %v1882
        %v2018 = vunpack.c.l.b16 %v1883
        %v2019 = vunpack.c.l.b16 %v1884
        %v2020 = vunpack.c.l.b16 %v1885
        %v2021 = vunpack.c.l.b16 %v1886
        %v2022 = vunpack.c.l.b16 %v1887
        %v2023 = vunpack.c.l.b16 %v1888
        %v2024 = vunpack.c.l.b16 %v1889
        %v2025 = vunpack.c.l.b16 %v1890
        %v2026 = vunpack.c.l.b16 %v1891
        %v2027 = vunpack.c.l.b16 %v1892
        %v2028 = vunpack.c.l.b16 %v1893
        %v2029 = vunpack.c.l.b16 %v1894
        %v2030 = vunpack.c.l.b16 %v1895
        %v2031 = vunpack.c.l.b16 %v1896
        %v2032 = vunpack.c.l.b16 %v1897
        %v2033 = vunpack.c.l.b16 %v1898
        %v2034 = vpack.c.b16 %v1971, %v1970
        %v2035 = vpack.c.b16 %v1973, %v1972
        %v2036 = vpack.c.b16 %v1975, %v1974
        %v2037 = vpack.c.b16 %v1977, %v1976
        %v2038 = vpack.c.b16 %v1979, %v1978
        %v2039 = vpack.c.b16 %v1981, %v1980
        %v2040 = vpack.c.b16 %v1983, %v1982
        %v2041 = vpack.c.b16 %v1985, %v1984
        %v2042 = vpack.c.b16 %v1987, %v1986
        %v2043 = vpack.c.b16 %v1989, %v1988
        %v2044 = vpack.c.b16 %v1991, %v1990
        %v2045 = vpack.c.b16 %v1993, %v1992
        %v2046 = vpack.c.b16 %v1995, %v1994
        %v2047 = vpack.c.b16 %v1997, %v1996
        %v2048 = vpack.c.b16 %v1999, %v1998
        %v2049 = vpack.c.b16 %v2001, %v2000
        %v2050 = vpack.c.b16 %v2003, %v2002
        %v2051 = vpack.c.b16 %v2005, %v2004
        %v2052 = vpack.c.b16 %v2007, %v2006
        %v2053 = vpack.c.b16 %v2009, %v2008
        %v2054 = vpack.c.b16 %v2011, %v2010
        %v2055 = vpack.c.b16 %v2013, %v2012
        %v2056 = vpack.c.b16 %v2015, %v2014
        %v2057 = vpack.c.b16 %v2017, %v2016
        %v2058 = vpack.c.b16 %v2019, %v2018
        %v2059 = vpack.c.b16 %v2021, %v2020
        %v2060 = vpack.c.b16 %v2023, %v2022
        %v2061 = vpack.c.b16 %v2025, %v2024
        %v2062 = vpack.c.b16 %v2027, %v2026
        %v2063 = vpack.c.b16 %v2029, %v2028
        %v2064 = vpack.c.b16 %v2031, %v2030
        %v2065 = vpack.c.b16 %v2033, %v2032
        %2098 = vmatprep.subr.bf16.mxu0 0
        %2099 = vmatpush1.bf16.msra.mxu0 %v2041
        %2100 = vmatprep.subr.bf16.mxu0 0
        %2101 = vmatpush1.bf16.msra.mxu0 %v2040
        %2102 = vmatprep.subr.bf16.mxu0 0
        %2103 = vmatpush1.bf16.msra.mxu0 %v2039
        %2104 = vmatprep.subr.bf16.mxu0 0
        %2105 = vmatpush1.bf16.msra.mxu0 %v2038
        %2106 = vmatprep.subr.bf16.mxu0 0
        %2107 = vmatpush1.bf16.msra.mxu0 %v2037
        %2108 = vmatprep.subr.bf16.mxu0 0
        %2109 = vmatpush1.bf16.msra.mxu0 %v2036
        %2110 = vmatprep.subr.bf16.mxu0 0
        %2111 = vmatpush1.bf16.msra.mxu0 %v2035
        %2112 = vmatprep.subr.bf16.mxu0 0
        %2113 = vmatpush1.bf16.msra.mxu0 %v2034
        %2114 = vmatprep.subr.bf16.mxu0 0
        %2115 = vmatpush2.bf16.msra.mxu0 %v2049
        %2116 = vmatprep.subr.bf16.mxu0 0
        %2117 = vmatpush2.bf16.msra.mxu0 %v2048
        %2118 = vmatprep.subr.bf16.mxu0 0
        %2119 = vmatpush2.bf16.msra.mxu0 %v2047
        %2120 = vmatprep.subr.bf16.mxu0 0
        %2121 = vmatpush2.bf16.msra.mxu0 %v2046
        %2122 = vmatprep.subr.bf16.mxu0 0
        %2123 = vmatpush2.bf16.msra.mxu0 %v2045
        %2124 = vmatprep.subr.bf16.mxu0 0
        %2125 = vmatpush2.bf16.msra.mxu0 %v2044
        %2126 = vmatprep.subr.bf16.mxu0 0
        %2127 = vmatpush2.bf16.msra.mxu0 %v2043
        %2128 = vmatprep.subr.bf16.mxu0 0
        %2129 = vmatpush2.bf16.msra.mxu0 %v2042
        %2130 = vmatprep.mubr.bf16.mxu0 %v1832
        %2131 = vmatmul.mubr.bf16.gmra.mxu0 %v1831
        %v2132 = vpop.f32.mrf.mxu0
        %v2133 = vadd.f32 %v1904, %v2132
        %v2134 = vpop.f32.mrf.mxu0
        %v2135 = vpop.f32.mrf.mxu0
        %v2136 = vpop.f32.mrf.mxu0
        %2137 = vdwg.mxu0
        %2138 = vmatprep.subr.bf16.mxu0 0
        %2139 = vmatpush1.bf16.msra.mxu0 %v2057
        %2140 = vmatprep.subr.bf16.mxu0 0
        %2141 = vmatpush1.bf16.msra.mxu0 %v2056
        %2142 = vmatprep.subr.bf16.mxu0 0
        %2143 = vmatpush1.bf16.msra.mxu0 %v2055
        %2144 = vmatprep.subr.bf16.mxu0 0
        %2145 = vmatpush1.bf16.msra.mxu0 %v2054
        %2146 = vmatprep.subr.bf16.mxu0 0
        %2147 = vmatpush1.bf16.msra.mxu0 %v2053
        %2148 = vmatprep.subr.bf16.mxu0 0
        %2149 = vmatpush1.bf16.msra.mxu0 %v2052
        %2150 = vmatprep.subr.bf16.mxu0 0
        %2151 = vmatpush1.bf16.msra.mxu0 %v2051
        %2152 = vmatprep.subr.bf16.mxu0 0
        %2153 = vmatpush1.bf16.msra.mxu0 %v2050
        %2154 = vmatprep.subr.bf16.mxu0 0
        %2155 = vmatpush2.bf16.msra.mxu0 %v2065
        %2156 = vmatprep.subr.bf16.mxu0 0
        %2157 = vmatpush2.bf16.msra.mxu0 %v2064
        %2158 = vmatprep.subr.bf16.mxu0 0
        %2159 = vmatpush2.bf16.msra.mxu0 %v2063
        %2160 = vmatprep.subr.bf16.mxu0 0
        %2161 = vmatpush2.bf16.msra.mxu0 %v2062
        %2162 = vmatprep.subr.bf16.mxu0 0
        %2163 = vmatpush2.bf16.msra.mxu0 %v2061
        %2164 = vmatprep.subr.bf16.mxu0 0
        %2165 = vmatpush2.bf16.msra.mxu0 %v2060
        %2166 = vmatprep.subr.bf16.mxu0 0
        %2167 = vmatpush2.bf16.msra.mxu0 %v2059
        %2168 = vmatprep.subr.bf16.mxu0 0
        %2169 = vmatpush2.bf16.msra.mxu0 %v2058
        %2170 = vmatprep.mubr.bf16.mxu0 %v1834
        %2171 = vmatmul.mubr.bf16.gmra.mxu0 %v1833
        %v2172 = vpop.f32.mrf.mxu0
        %v2173 = vadd.f32 %v2133, %v2172
        %v2174 = vpop.f32.mrf.mxu0
        %v2175 = vpop.f32.mrf.mxu0
        %v2176 = vpop.f32.mrf.mxu0
        %2177 = vdwg.mxu0
        %v2178 = vadd.f32 %v1529, %v2173
        %v2179 = vld [vmem:[%s13] sm:$0x1]
        %v2180 = vld [vmem:[%s14] sm:$0x1]
        %2181 = vadd.xlane.f32.xlu0 %v2178
        %v2182 = vpop.xlane.xlu0 %2181
        %v2183 = vmul.f32 %v2182, %v1506
        %v2184 = vsub.f32 %v2178, %v2183
        %v2185 = vmul.f32 %v2184, %v2184
        %2186 = vadd.xlane.f32.xlu0 %v2185
        %v2187 = vpop.xlane.xlu0 %2186
        %v2188 = vmul.f32 %v2187, %v1506
        %v2189 = vadd.f32 %v2188, 1e-05
        %v2190 = vrsqrt.pop %v2189
        %v2191 = vmul.f32 %v2184, %v2190
        %v2193 = vlaneseq
        %v2194 = vshrl.u32 %v2193, 7
        %v2195 = vsub.s32 0, %v2194
        %v2196 = vrot.slane %v2179, %v2195
        %v2198 = vmul.f32 %v2191, %v2196
        %v2200 = vlaneseq
        %v2201 = vshrl.u32 %v2200, 7
        %v2202 = vsub.s32 0, %v2201
        %v2203 = vrot.slane %v2180, %v2202
        %v2205 = vadd.f32 %v2198, %v2203
        %2206 = vst [vmem:[%s609] sm:$0xff] %v2205
        %s2207 = sand.u32 %s364, 1
        %s2208 = scalar_lea.sflag [#allocation5], %s2207
        %s2209 = sand.u32 %s364, 1
        %s2210 = smul.addr %s2209, 8
        %s2211 = scalar_lea.vmem [#allocation17], %s2210
        // Predicated region
        $region113: #{tpu_custom_call.1} parent=79 // pred_check
          %p2212 = pneg %p374
        $region114: #{tpu_custom_call.1} parent=79 // pred_check_branch
          %2214 = sbr.rel (%p2212) target = $region116
        $region115: #{tpu_custom_call.1} parent=79 // pred_region
          %s2216 = ssub.s32 128, 128
          %2217 = vsyncadd %s2208, %s2216
          %s2218 = smul.addr %s36, 128
          %s2219 = scalar_lea.hbm %s15, %s2218
          %s2221 = sshll.u32 %s2211, 4
          %s2222 = int_to_ptr.vmem [resolvable:$true] %s2221
          %2224 = dma.vmem_to_hbm [thread:$0]  %s2222, 128, %s2219, %s2208
        $region116: #{tpu_custom_call.1} parent=79 // pred_fallthru
          _
      $region80: #{tpu_custom_call.1} parent=5 // pred_fallthru
        _
      %p2225 = scmp.le.s32.totalorder 2, %s31
      // Predicated region
      $region117: #{tpu_custom_call.1} parent=5 // pred_check
        %p2226 = pneg %p2225
      $region118: #{tpu_custom_call.1} parent=5 // pred_check_branch
        %2228 = sbr.rel (%p2226) target = $region120
      $region119: #{tpu_custom_call.1} parent=5 // pred_region
        %s2229 = ssub.s32 %s31, 2
        // Predicated region
        $region121: #{tpu_custom_call.1} parent=119 // pred_check
          %p2230 = pneg %p380
        $region122: #{tpu_custom_call.1} parent=119 // pred_check_branch
          %2232 = sbr.rel (%p2230) target = $region124
        $region123: #{tpu_custom_call.1} parent=119 // pred_region
          %s2233 = sand.u32 %s365, 1
          %s2234 = scalar_lea.sflag [#allocation5], %s2233
          %s2235 = sand.u32 %s365, 1
          %s2236 = smul.addr %s2235, 8
          %s2237 = scalar_lea.vmem [#allocation17], %s2236
          %2238 = dma.done %s2234, 128
        $region124: #{tpu_custom_call.1} parent=119 // pred_fallthru
          _
      $region120: #{tpu_custom_call.1} parent=5 // pred_fallthru
        _
    $region6: #{tpu_custom_call.1} parent=1 // loop_footer
      %s35 = sadd.s32 1, %s31
    $region7: #{tpu_custom_call.1} parent=1 // loop_footer_branch
      %30 = sbr.rel target = $region3
    $region8: #{tpu_custom_call.1} parent=1 // loop_exit
      _
    %2239 = vsyncpa [#allocation4], 1
    %s2240 = scalar_lea.sflag [#allocation4], 1
    %2241 = vsyncpa %s2240, 1
    %2242 = vsyncpa [#allocation7], 1
    %2243 = vsyncpa [#allocation10], 1
    %2244 = vsyncpa [#allocation13], 1
    %2245 = vsyncpa [#allocation16], 1
    %2246 = vsyncpa [#allocation5], 1
    %s2247 = scalar_lea.sflag [#allocation5], 1
    %2248 = vsyncpa %s2247, 1

</llo_original>
